<compile_context>
chip_gen: v6e
topology: v6e:2x2x1
jax: 0.10.0
libtpu: 0.0.40
codegen_flags: <defaults>
</compile_context>

<pallas_src>
import functools

import jax
import jax.numpy as jnp
from jax.experimental import pallas as pl
from jax.experimental.pallas import tpu as pltpu

LANE = 128   # lane-dense padding for embedding / hidden / output feature dims


# ------------------------------ Pallas kernel --------------------------------

def _occflow_kernel(pd, tf, t_ref, geom_ref, patches_ref, traj_ref, amask_ref,
                    wrect_ref, wsq_ref, rows_ref, out_ref):
    f32 = jnp.float32
    bf16 = jnp.bfloat16

    rows = rows_ref[...]                                   # [16, 128] f32 table
    b_p, b_t, b_f, b_1 = rows[0:1], rows[1:2], rows[2:3], rows[3:4]
    b_o, w1t = rows[7:8], rows[8:9]
    w1hx, w1hy = rows[9:10], rows[10:11]
    fx, fy, offs = rows[11:12], rows[12:13], rows[13:14]

    # ---- scene encoder for this batch: pool BEFORE projecting ----
    # mean(patches) @ wp + bp  ==  mean(patches @ wp + bp)   (tiny-M matmuls)
    pooled_road = jnp.mean(patches_ref[0], axis=0, keepdims=True)       # [1,PD]
    road_emb = jnp.dot(pooled_road.astype(bf16), wrect_ref[0:pd, :],
                       preferred_element_type=f32) + b_p                # [1,E*]

    m = amask_ref[0]                                                    # [A,1]
    msum = jnp.sum(m, axis=0, keepdims=True)                            # [1,1]
    denom = msum + 1e-6
    pooled_traj = jnp.sum(traj_ref[0] * (m / denom), axis=0,
                          keepdims=True)                                # [1,TF]
    traj_emb = (jnp.dot(pooled_traj.astype(bf16), wrect_ref[pd:pd + tf, :],
                        preferred_element_type=f32)
                + b_t * (msum / denom))                                 # [1,E*]

    fused = jnp.maximum(road_emb + traj_emb, 0.0)
    ctx = jnp.dot(fused.astype(bf16), wsq_ref[0],
                  preferred_element_type=f32) + b_f                     # [1,E*]
    ctx_proj = jnp.dot(ctx.astype(bf16), wsq_ref[1],
                       preferred_element_type=f32)                      # [1,H*]

    # ---- flow-field MLP over this batch's N query points ----
    geom = geom_ref[0]                                   # [N, 3] = (x, y, mask)
    hx, hy, fmask = geom[:, 0:1], geom[:, 1:2], geom[:, 2:3]

    # All 4K Fourier features from ONE phase array + ONE sin (cos via +pi/2
    # offset row). Phase stays f32: pi*2^k amplifies input rounding.
    phase = hx * fx + hy * fy + offs                     # [N,128] f32, VPU only
    sinf = jnp.sin(phase)                                # single EUP pass

    t = t_ref[0]
    z = (jnp.dot(sinf.astype(bf16), wsq_ref[2], preferred_element_type=f32)
         + hx * w1hx + hy * w1hy                         # linear (x,y) on VPU
         + ctx_proj                                      # per-batch context
         + t * w1t + b_1)
    z = jnp.maximum(z, 0.0)

    for i in range(3):                                   # hidden layers 2..4
        z = jnp.maximum(
            jnp.dot(z.astype(bf16), wsq_ref[3 + i],
                    preferred_element_type=f32) + rows[4 + i:5 + i], 0.0)

    flow = jnp.dot(z.astype(bf16), wsq_ref[6],
                   preferred_element_type=f32) + b_o
    out_ref[0] = flow * fmask                            # lane-dense (N,128) vst


# ------------------------------- helpers / wrapper ----------------------------

def patchify(road_map, w):
    B, H, W = road_map.shape
    x = road_map.reshape(B, H // w, w, W // w, w)
    x = jnp.transpose(x, (0, 1, 3, 2, 4))
    return x.reshape(B, (H // w) * (W // w), w * w)


def pack_params(p, cfg):
    """One-time packing of logical (unpadded) weights into kernel operands."""
    f32 = jnp.float32
    K = cfg["n_fourier"]
    PD, E = p["wp"].shape
    TF = p["wt"].shape[0]
    Hh = p["b1"].shape[0]
    assert 4 * K <= LANE and E <= LANE and Hh <= LANE
    assert PD % 16 == 0 and TF % 16 == 0   # clean bf16 sublane slices in-kernel

    def pad2(x, r, c):
        x = x.astype(f32)
        return jnp.pad(x, ((0, r - x.shape[0]), (0, c - x.shape[1])))

    def padrow(v):
        v = v.astype(f32)
        return jnp.pad(v, (0, LANE - v.shape[0]))

    # wp | wt stacked along rows, stored bf16 (MXU-native, halves DMA bytes).
    wrect = jnp.concatenate([pad2(p["wp"], PD, LANE),
                             pad2(p["wt"], TF, LANE)], axis=0).astype(jnp.bfloat16)

    # Fourier first-layer weight: row c matches phase column c
    # (cols: sin-x | cos-x | sin-y | cos-y, rest zero).
    w1f = jnp.zeros((LANE, LANE), f32)
    w1f = w1f.at[0 * K:1 * K, :Hh].set(p["w1sx"].astype(f32))
    w1f = w1f.at[1 * K:2 * K, :Hh].set(p["w1cx"].astype(f32))
    w1f = w1f.at[2 * K:3 * K, :Hh].set(p["w1sy"].astype(f32))
    w1f = w1f.at[3 * K:4 * K, :Hh].set(p["w1cy"].astype(f32))

    wsq = jnp.stack([pad2(p["wf"], LANE, LANE),       # 0: scene fuse
                     pad2(p["w1ctx"], LANE, LANE),    # 1: context -> hidden
                     w1f,                             # 2: Fourier -> hidden
                     pad2(p["wh"][0], LANE, LANE),    # 3..5: hidden stack
                     pad2(p["wh"][1], LANE, LANE),
                     pad2(p["wh"][2], LANE, LANE),
                     pad2(p["wo"], LANE, LANE)],      # 6: output head
                    axis=0).astype(jnp.bfloat16)

    # Packed f32 row table: biases, w1t, linear (x,y) rows, Fourier freq rows.
    freqs = jnp.pi * (2.0 ** jnp.arange(K, dtype=f32))
    fx = jnp.zeros((LANE,), f32).at[0:K].set(freqs).at[K:2 * K].set(freqs)
    fy = jnp.zeros((LANE,), f32).at[2 * K:3 * K].set(freqs).at[3 * K:4 * K].set(freqs)
    offs = (jnp.zeros((LANE,), f32)
            .at[K:2 * K].set(jnp.pi / 2).at[3 * K:4 * K].set(jnp.pi / 2))
    zero = jnp.zeros((LANE,), f32)
    rows = jnp.stack([padrow(p["bp"]),      # 0
                      padrow(p["bt"]),      # 1
                      padrow(p["bf"]),      # 2
                      padrow(p["b1"]),      # 3
                      padrow(p["bh"][0]),   # 4
                      padrow(p["bh"][1]),   # 5
                      padrow(p["bh"][2]),   # 6
                      padrow(p["bo"]),      # 7
                      padrow(p["w1t"]),     # 8
                      padrow(p["w1h"][0]),  # 9
                      padrow(p["w1h"][1]),  # 10
                      fx, fy, offs,         # 11, 12, 13
                      zero, zero], axis=0)  # [16, 128]
    return dict(wrect=wrect, wsq=wsq, rows=rows)


def occupancy_flow_forward(t, h, road_map, agent_trajectories, agent_mask,
                           flow_field_mask, packed, cfg):
    w = cfg["window"]
    B, N, _ = h.shape
    patches = patchify(road_map.astype(jnp.float32), w)          # [B, P, PD]
    _, P, PD = patches.shape
    _, A, T, F = agent_trajectories.shape
    TF = T * F
    traj = agent_trajectories.astype(jnp.float32).reshape(B, A, TF)
    amask = agent_mask.astype(jnp.float32)[..., None]             # [B, A, 1]
    geom = jnp.concatenate(
        [h.astype(jnp.float32),
         flow_field_mask.astype(jnp.float32)[..., None]], axis=-1)  # [B, N, 3]
    t_arr = jnp.asarray(t, jnp.float32).reshape(1)

    wrect, wsq, rows = packed["wrect"], packed["wsq"], packed["rows"]
    kernel = functools.partial(_occflow_kernel, PD, TF)

    out = pl.pallas_call(
        kernel,
        out_shape=jax.ShapeDtypeStruct((B, N, LANE), jnp.float32),
        grid_spec=pltpu.PrefetchScalarGridSpec(
            num_scalar_prefetch=0,
            grid=(B,),                                            # parallel over batch
            in_specs=[
                pl.BlockSpec(memory_space=pltpu.MemorySpace.SMEM),   # t (scalar)
                pl.BlockSpec((1, N, 3), lambda b: (b, 0, 0)),        # geom
                pl.BlockSpec((1, P, PD), lambda b: (b, 0, 0)),       # road patches
                pl.BlockSpec((1, A, TF), lambda b: (b, 0, 0)),       # trajectories
                pl.BlockSpec((1, A, 1), lambda b: (b, 0, 0)),        # agent mask
                pl.BlockSpec(wrect.shape, lambda b: (0, 0)),         # wp | wt
                pl.BlockSpec(wsq.shape, lambda b: (0, 0, 0)),        # square weights
                pl.BlockSpec(rows.shape, lambda b: (0, 0)),          # bias/row table
            ],
            out_specs=pl.BlockSpec((1, N, LANE), lambda b: (b, 0, 0)),
        ),
        compiler_params=pltpu.CompilerParams(
            dimension_semantics=("parallel",)),
    )(t_arr, geom, patches, traj, amask, wrect, wsq, rows)

    return out[..., :2]                                           # [B, N, 2]


# ----------------------------- pure-JAX reference -----------------------------

def reference_forward(t, h, road_map, agent_trajectories, agent_mask,
                      flow_field_mask, p, cfg):
    w = cfg["window"]
    K = cfg["n_fourier"]
    patches = patchify(road_map, w)
    road = jnp.einsum("bpd,de->bpe", patches, p["wp"]) + p["bp"]
    road_emb = jnp.mean(road, axis=1)
    B, A, T, F = agent_trajectories.shape
    traj = agent_trajectories.reshape(B, A, T * F)
    te = jnp.einsum("bad,de->bae", traj, p["wt"]) + p["bt"]
    m = agent_mask.astype(jnp.float32)[..., None]
    traj_emb = jnp.sum(te * m, axis=1) / (jnp.sum(m, axis=(1, 2))[:, None] + 1e-6)
    fused = jnp.maximum(road_emb + traj_emb, 0.0)
    ctx = fused @ p["wf"] + p["bf"]

    freqs = jnp.pi * (2.0 ** jnp.arange(K, dtype=jnp.float32))
    hx = h[..., 0:1]
    hy = h[..., 1:2]
    sx = jnp.sin(hx * freqs)
    cx = jnp.cos(hx * freqs)
    sy = jnp.sin(hy * freqs)
    cy = jnp.cos(hy * freqs)
    z = (jnp.einsum("bnk,kh->bnh", h, p["w1h"])
         + jnp.einsum("bnk,kh->bnh", sx, p["w1sx"])
         + jnp.einsum("bnk,kh->bnh", cx, p["w1cx"])
         + jnp.einsum("bnk,kh->bnh", sy, p["w1sy"])
         + jnp.einsum("bnk,kh->bnh", cy, p["w1cy"])
         + (ctx @ p["w1ctx"])[:, None, :]
         + jnp.float32(t) * p["w1t"]
         + p["b1"])
    z = jnp.maximum(z, 0.0)
    for i in range(3):
        z = jnp.maximum(
            jnp.einsum("bnh,hg->bng", z, p["wh"][i]) + p["bh"][i], 0.0)
    flow = jnp.einsum("bnh,hg->bng", z, p["wo"]) + p["bo"]
    return flow * flow_field_mask[..., None].astype(jnp.float32)


# ----------------------------------- main --------------------------------------

if __name__ == "__main__":
    key = jax.random.PRNGKey(0)

    # Module hyperparameters (small, synthetic).
    road_map_image_size = 16
    road_map_window_size = 4          # -> P = 16 patches of PD = 16 pixels
    trajectory_feature_dim = 4
    embedding_dim = 32                # logical E (zero-padded to 128 lanes)
    flow_field_hidden_dim = 32        # logical H (zero-padded to 128 lanes)
    flow_field_fourier_features = 4   # K

    B, A, T, N = 2, 4, 8, 64
    wsz = road_map_window_size
    PD = wsz * wsz
    TF = T * trajectory_feature_dim
    K = flow_field_fourier_features
    E, Hh = embedding_dim, flow_field_hidden_dim
    cfg = dict(window=wsz, n_fourier=K)

    keys = jax.random.split(key, 24)

    def nrm(k, s):
        return 0.1 * jax.random.normal(k, s, jnp.float32)

    # Logical (unpadded) weights: used by the f32 reference; packed for the kernel.
    params = dict(
        wp=nrm(keys[0], (PD, E)),   bp=nrm(keys[1], (E,)),
        wt=nrm(keys[2], (TF, E)),   bt=nrm(keys[3], (E,)),
        wf=nrm(keys[4], (E, E)),    bf=nrm(keys[5], (E,)),
        w1h=nrm(keys[6], (2, Hh)),
        w1sx=nrm(keys[7], (K, Hh)), w1cx=nrm(keys[8], (K, Hh)),
        w1sy=nrm(keys[9], (K, Hh)), w1cy=nrm(keys[10], (K, Hh)),
        w1ctx=nrm(keys[11], (E, Hh)),
        w1t=nrm(keys[12], (Hh,)),   b1=nrm(keys[13], (Hh,)),
        wh=nrm(keys[14], (3, Hh, Hh)), bh=nrm(keys[15], (3, Hh)),
        wo=nrm(keys[16], (Hh, 2)),  bo=nrm(keys[17], (2,)),
    )
    packed = pack_params(params, cfg)   # one-time setup, not per forward call

    # Inputs (PyTorch road_map would be [B, 1, H, W]; channel squeezed here).
    road_map = jax.random.uniform(
        keys[18], (B, road_map_image_size, road_map_image_size), jnp.float32)
    agent_trajectories = jax.random.normal(
        keys[19], (B, A, T, trajectory_feature_dim), jnp.float32)
    agent_mask = jnp.array([[1.0, 1.0, 1.0, 0.0],
                            [1.0, 1.0, 0.0, 0.0]], jnp.float32)      # [B, A]
    h = jax.random.uniform(keys[20], (B, N, 2), jnp.float32,
                           minval=-1.0, maxval=1.0)
    flow_field_mask = jnp.ones((B, N), jnp.float32).at[:, -4:].set(0.0)
    t = 0.5

    fwd = jax.jit(lambda tt, hh, rm, at, am, fm, pk:
                  occupancy_flow_forward(tt, hh, rm, at, am, fm, pk, cfg))

    flow = fwd(t, h, road_map, agent_trajectories, agent_mask,
               flow_field_mask, packed)
    flow = jax.block_until_ready(flow)

    ref = reference_forward(t, h, road_map, agent_trajectories, agent_mask,
                            flow_field_mask, params, cfg)

    assert flow.shape == (B, N, 2)
    assert bool(jnp.all(jnp.isfinite(flow)))
    # bf16 MXU operands (f32 accumulation) vs. the pure-f32 reference:
    # observed error is well below this bound at these value magnitudes.
    assert bool(jnp.allclose(flow, ref, rtol=1e-2, atol=1e-2)), \
        "mismatch vs reference"

    print("KERNEL_OK")
</pallas_src>

<mosaic_0001>
module attributes {stable_mosaic.version = 11 : i64} {
  func.func @_occflow_kernel(%arg0: i32, %arg1: memref<1xf32, #tpu.memory_space<smem>>, %arg2: memref<1x64x3xf32, #tpu.memory_space<vmem>>, %arg3: memref<1x16x16xf32, #tpu.memory_space<vmem>>, %arg4: memref<1x4x32xf32, #tpu.memory_space<vmem>>, %arg5: memref<1x4x1xf32, #tpu.memory_space<vmem>>, %arg6: memref<48x128xbf16, #tpu.memory_space<vmem>>, %arg7: memref<7x128x128xbf16, #tpu.memory_space<vmem>>, %arg8: memref<16x128xf32, #tpu.memory_space<vmem>>, %arg9: memref<1x64x128xf32, #tpu.memory_space<vmem>>) attributes {dimension_semantics = [#tpu.dimension_semantics<parallel>], iteration_bounds = array<i64: 2>, scalar_prefetch = 0 : i64, scratch_operands = 0 : i64, tpu.core_type = #tpu.core_type<tc>, window_params = [{transform_indices = @transform_0, window_bounds = array<i64: 1>}, {transform_indices = @transform_1, window_bounds = array<i64: 1, 64, 3>}, {transform_indices = @transform_2, window_bounds = array<i64: 1, 16, 16>}, {transform_indices = @transform_3, window_bounds = array<i64: 1, 4, 32>}, {transform_indices = @transform_4, window_bounds = array<i64: 1, 4, 1>}, {pipeline_mode = #tpu.pipeline_mode<synchronous>, transform_indices = @transform_5, window_bounds = array<i64: 48, 128>}, {pipeline_mode = #tpu.pipeline_mode<synchronous>, transform_indices = @transform_6, window_bounds = array<i64: 7, 128, 128>}, {pipeline_mode = #tpu.pipeline_mode<synchronous>, transform_indices = @transform_7, window_bounds = array<i64: 16, 128>}, {transform_indices = @transform_8, window_bounds = array<i64: 1, 64, 128>}]} {
    %c0 = arith.constant 0 : index
    %c0_0 = arith.constant 0 : index
    %0 = vector.load %arg8[%c0, %c0_0] : memref<16x128xf32, #tpu.memory_space<vmem>>, vector<16x128xf32>
    %1 = vector.extract_strided_slice %0 {offsets = [0, 0], sizes = [1, 128], strides = [1, 1]} : vector<16x128xf32> to vector<1x128xf32>
    %2 = vector.extract_strided_slice %0 {offsets = [1, 0], sizes = [1, 128], strides = [1, 1]} : vector<16x128xf32> to vector<1x128xf32>
    %3 = vector.extract_strided_slice %0 {offsets = [2, 0], sizes = [1, 128], strides = [1, 1]} : vector<16x128xf32> to vector<1x128xf32>
    %4 = vector.extract_strided_slice %0 {offsets = [3, 0], sizes = [1, 128], strides = [1, 1]} : vector<16x128xf32> to vector<1x128xf32>
    %5 = vector.extract_strided_slice %0 {offsets = [7, 0], sizes = [1, 128], strides = [1, 1]} : vector<16x128xf32> to vector<1x128xf32>
    %6 = vector.extract_strided_slice %0 {offsets = [8, 0], sizes = [1, 128], strides = [1, 1]} : vector<16x128xf32> to vector<1x128xf32>
    %7 = vector.extract_strided_slice %0 {offsets = [9, 0], sizes = [1, 128], strides = [1, 1]} : vector<16x128xf32> to vector<1x128xf32>
    %8 = vector.extract_strided_slice %0 {offsets = [10, 0], sizes = [1, 128], strides = [1, 1]} : vector<16x128xf32> to vector<1x128xf32>
    %9 = vector.extract_strided_slice %0 {offsets = [11, 0], sizes = [1, 128], strides = [1, 1]} : vector<16x128xf32> to vector<1x128xf32>
    %10 = vector.extract_strided_slice %0 {offsets = [12, 0], sizes = [1, 128], strides = [1, 1]} : vector<16x128xf32> to vector<1x128xf32>
    %11 = vector.extract_strided_slice %0 {offsets = [13, 0], sizes = [1, 128], strides = [1, 1]} : vector<16x128xf32> to vector<1x128xf32>
    %c0_1 = arith.constant 0 : index
    %c0_2 = arith.constant 0 : index
    %c0_3 = arith.constant 0 : index
    %12 = vector.load %arg3[%c0_1, %c0_2, %c0_3] : memref<1x16x16xf32, #tpu.memory_space<vmem>>, vector<1x16x16xf32>
    %13 = vector.shape_cast %12 : vector<1x16x16xf32> to vector<16x16xf32>
    %cst = arith.constant dense<0.000000e+00> : vector<16xf32>
    %14 = vector.multi_reduction <add>, %13, %cst [0] : vector<16x16xf32> to vector<16xf32>
    %15 = vector.shape_cast %14 : vector<16xf32> to vector<1x16xf32>
    %cst_4 = arith.constant 1.600000e+01 : f32
    %16 = vector.broadcast %cst_4 : f32 to vector<1x16xf32>
    %17 = arith.divf %15, %16 : vector<1x16xf32>
    %18 = arith.truncf %17 : vector<1x16xf32> to vector<1x16xbf16>
    %c0_5 = arith.constant 0 : index
    %c0_6 = arith.constant 0 : index
    %19 = vector.load %arg6[%c0_5, %c0_6] : memref<48x128xbf16, #tpu.memory_space<vmem>>, vector<16x128xbf16>
    %cst_7 = arith.constant dense<0.000000e+00> : vector<1x128xf32>
    %20 = tpu.matmul %18, %19, %cst_7 {dimension_numbers = #tpu.dot_dimension_numbers<[1], [0], [0], [1], [0, 0, 1, 1], [], []>} : vector<1x16xbf16>, vector<16x128xbf16>, vector<1x128xf32> -> vector<1x128xf32>
    %21 = arith.addf %20, %1 : vector<1x128xf32>
    %c0_8 = arith.constant 0 : index
    %c0_9 = arith.constant 0 : index
    %c0_10 = arith.constant 0 : index
    %22 = vector.load %arg5[%c0_8, %c0_9, %c0_10] : memref<1x4x1xf32, #tpu.memory_space<vmem>>, vector<1x4x1xf32>
    %23 = vector.shape_cast %22 : vector<1x4x1xf32> to vector<4x1xf32>
    %cst_11 = arith.constant dense<0.000000e+00> : vector<1xf32>
    %24 = vector.multi_reduction <add>, %23, %cst_11 [0] : vector<4x1xf32> to vector<1xf32>
    %25 = vector.shape_cast %24 : vector<1xf32> to vector<1x1xf32>
    %cst_12 = arith.constant 9.99999997E-7 : f32
    %26 = vector.broadcast %cst_12 : f32 to vector<1x1xf32>
    %27 = arith.addf %25, %26 : vector<1x1xf32>
    %c0_13 = arith.constant 0 : index
    %c0_14 = arith.constant 0 : index
    %c0_15 = arith.constant 0 : index
    %28 = vector.load %arg4[%c0_13, %c0_14, %c0_15] : memref<1x4x32xf32, #tpu.memory_space<vmem>>, vector<1x4x32xf32>
    %29 = vector.shape_cast %28 : vector<1x4x32xf32> to vector<4x32xf32>
    %30 = vector.broadcast %27 : vector<1x1xf32> to vector<4x1xf32>
    %31 = arith.divf %23, %30 : vector<4x1xf32>
    %32 = vector.broadcast %31 : vector<4x1xf32> to vector<4x32xf32>
    %33 = arith.mulf %29, %32 : vector<4x32xf32>
    %cst_16 = arith.constant dense<0.000000e+00> : vector<32xf32>
    %34 = vector.multi_reduction <add>, %33, %cst_16 [0] : vector<4x32xf32> to vector<32xf32>
    %35 = vector.shape_cast %34 : vector<32xf32> to vector<1x32xf32>
    %36 = arith.truncf %35 : vector<1x32xf32> to vector<1x32xbf16>
    %c16 = arith.constant 16 : index
    %c0_17 = arith.constant 0 : index
    %37 = vector.load %arg6[%c16, %c0_17] : memref<48x128xbf16, #tpu.memory_space<vmem>>, vector<32x128xbf16>
    %cst_18 = arith.constant dense<0.000000e+00> : vector<1x128xf32>
    %38 = tpu.matmul %36, %37, %cst_18 {dimension_numbers = #tpu.dot_dimension_numbers<[1], [0], [0], [1], [0, 0, 1, 1], [], []>} : vector<1x32xbf16>, vector<32x128xbf16>, vector<1x128xf32> -> vector<1x128xf32>
    %39 = arith.divf %25, %27 : vector<1x1xf32>
    %40 = vector.broadcast %39 : vector<1x1xf32> to vector<1x128xf32>
    %41 = arith.mulf %2, %40 : vector<1x128xf32>
    %42 = arith.addf %38, %41 : vector<1x128xf32>
    %43 = arith.addf %21, %42 : vector<1x128xf32>
    %cst_19 = arith.constant 0.000000e+00 : f32
    %44 = vector.broadcast %cst_19 : f32 to vector<1x128xf32>
    %45 = arith.maximumf %43, %44 : vector<1x128xf32>
    %46 = arith.truncf %45 : vector<1x128xf32> to vector<1x128xbf16>
    %c0_20 = arith.constant 0 : index
    %c0_21 = arith.constant 0 : index
    %c0_22 = arith.constant 0 : index
    %47 = vector.load %arg7[%c0_20, %c0_21, %c0_22] : memref<7x128x128xbf16, #tpu.memory_space<vmem>>, vector<1x128x128xbf16>
    %48 = vector.shape_cast %47 : vector<1x128x128xbf16> to vector<128x128xbf16>
    %cst_23 = arith.constant dense<0.000000e+00> : vector<1x128xf32>
    %49 = tpu.matmul %46, %48, %cst_23 {dimension_numbers = #tpu.dot_dimension_numbers<[1], [0], [0], [1], [0, 0, 1, 1], [], []>} : vector<1x128xbf16>, vector<128x128xbf16>, vector<1x128xf32> -> vector<1x128xf32>
    %50 = arith.addf %49, %3 : vector<1x128xf32>
    %51 = arith.truncf %50 : vector<1x128xf32> to vector<1x128xbf16>
    %c1 = arith.constant 1 : index
    %c0_24 = arith.constant 0 : index
    %c0_25 = arith.constant 0 : index
    %52 = vector.load %arg7[%c1, %c0_24, %c0_25] : memref<7x128x128xbf16, #tpu.memory_space<vmem>>, vector<1x128x128xbf16>
    %53 = vector.shape_cast %52 : vector<1x128x128xbf16> to vector<128x128xbf16>
    %cst_26 = arith.constant dense<0.000000e+00> : vector<1x128xf32>
    %54 = tpu.matmul %51, %53, %cst_26 {dimension_numbers = #tpu.dot_dimension_numbers<[1], [0], [0], [1], [0, 0, 1, 1], [], []>} : vector<1x128xbf16>, vector<128x128xbf16>, vector<1x128xf32> -> vector<1x128xf32>
    %c0_27 = arith.constant 0 : index
    %c0_28 = arith.constant 0 : index
    %c0_29 = arith.constant 0 : index
    %55 = vector.load %arg2[%c0_27, %c0_28, %c0_29] : memref<1x64x3xf32, #tpu.memory_space<vmem>>, vector<1x64x3xf32>
    %56 = vector.shape_cast %55 : vector<1x64x3xf32> to vector<64x3xf32>
    %57 = vector.extract_strided_slice %56 {offsets = [0, 0], sizes = [64, 1], strides = [1, 1]} : vector<64x3xf32> to vector<64x1xf32>
    %58 = vector.extract_strided_slice %56 {offsets = [0, 1], sizes = [64, 1], strides = [1, 1]} : vector<64x3xf32> to vector<64x1xf32>
    %59 = vector.extract_strided_slice %56 {offsets = [0, 2], sizes = [64, 1], strides = [1, 1]} : vector<64x3xf32> to vector<64x1xf32>
    %60 = vector.broadcast %57 : vector<64x1xf32> to vector<64x128xf32>
    %61 = vector.broadcast %9 : vector<1x128xf32> to vector<64x128xf32>
    %62 = arith.mulf %60, %61 : vector<64x128xf32>
    %63 = vector.broadcast %58 : vector<64x1xf32> to vector<64x128xf32>
    %64 = vector.broadcast %10 : vector<1x128xf32> to vector<64x128xf32>
    %65 = arith.mulf %63, %64 : vector<64x128xf32>
    %66 = arith.addf %62, %65 : vector<64x128xf32>
    %67 = vector.broadcast %11 : vector<1x128xf32> to vector<64x128xf32>
    %68 = arith.addf %66, %67 : vector<64x128xf32>
    %69 = math.sin %68 : vector<64x128xf32>
    %c0_30 = arith.constant 0 : index
    %70 = memref.load %arg1[%c0_30] : memref<1xf32, #tpu.memory_space<smem>>
    %71 = arith.truncf %69 : vector<64x128xf32> to vector<64x128xbf16>
    %c2 = arith.constant 2 : index
    %c0_31 = arith.constant 0 : index
    %c0_32 = arith.constant 0 : index
    %72 = vector.load %arg7[%c2, %c0_31, %c0_32] : memref<7x128x128xbf16, #tpu.memory_space<vmem>>, vector<1x128x128xbf16>
    %73 = vector.shape_cast %72 : vector<1x128x128xbf16> to vector<128x128xbf16>
    %cst_33 = arith.constant dense<0.000000e+00> : vector<64x128xf32>
    %74 = tpu.matmul %71, %73, %cst_33 {dimension_numbers = #tpu.dot_dimension_numbers<[1], [0], [0], [1], [0, 0, 1, 1], [], []>} : vector<64x128xbf16>, vector<128x128xbf16>, vector<64x128xf32> -> vector<64x128xf32>
    %75 = vector.broadcast %57 : vector<64x1xf32> to vector<64x128xf32>
    %76 = vector.broadcast %7 : vector<1x128xf32> to vector<64x128xf32>
    %77 = arith.mulf %75, %76 : vector<64x128xf32>
    %78 = arith.addf %74, %77 : vector<64x128xf32>
    %79 = vector.broadcast %58 : vector<64x1xf32> to vector<64x128xf32>
    %80 = vector.broadcast %8 : vector<1x128xf32> to vector<64x128xf32>
    %81 = arith.mulf %79, %80 : vector<64x128xf32>
    %82 = arith.addf %78, %81 : vector<64x128xf32>
    %83 = vector.broadcast %54 : vector<1x128xf32> to vector<64x128xf32>
    %84 = arith.addf %82, %83 : vector<64x128xf32>
    %85 = vector.broadcast %70 : f32 to vector<1x128xf32>
    %86 = arith.mulf %85, %6 : vector<1x128xf32>
    %87 = vector.broadcast %86 : vector<1x128xf32> to vector<64x128xf32>
    %88 = arith.addf %84, %87 : vector<64x128xf32>
    %89 = vector.broadcast %4 : vector<1x128xf32> to vector<64x128xf32>
    %90 = arith.addf %88, %89 : vector<64x128xf32>
    %cst_34 = arith.constant 0.000000e+00 : f32
    %91 = vector.broadcast %cst_34 : f32 to vector<64x128xf32>
    %92 = arith.maximumf %90, %91 : vector<64x128xf32>
    %93 = arith.truncf %92 : vector<64x128xf32> to vector<64x128xbf16>
    %c3 = arith.constant 3 : index
    %c0_35 = arith.constant 0 : index
    %c0_36 = arith.constant 0 : index
    %94 = vector.load %arg7[%c3, %c0_35, %c0_36] : memref<7x128x128xbf16, #tpu.memory_space<vmem>>, vector<1x128x128xbf16>
    %95 = vector.shape_cast %94 : vector<1x128x128xbf16> to vector<128x128xbf16>
    %cst_37 = arith.constant dense<0.000000e+00> : vector<64x128xf32>
    %96 = tpu.matmul %93, %95, %cst_37 {dimension_numbers = #tpu.dot_dimension_numbers<[1], [0], [0], [1], [0, 0, 1, 1], [], []>} : vector<64x128xbf16>, vector<128x128xbf16>, vector<64x128xf32> -> vector<64x128xf32>
    %97 = vector.extract_strided_slice %0 {offsets = [4, 0], sizes = [1, 128], strides = [1, 1]} : vector<16x128xf32> to vector<1x128xf32>
    %98 = vector.broadcast %97 : vector<1x128xf32> to vector<64x128xf32>
    %99 = arith.addf %96, %98 : vector<64x128xf32>
    %cst_38 = arith.constant 0.000000e+00 : f32
    %100 = vector.broadcast %cst_38 : f32 to vector<64x128xf32>
    %101 = arith.maximumf %99, %100 : vector<64x128xf32>
    %102 = arith.truncf %101 : vector<64x128xf32> to vector<64x128xbf16>
    %c4 = arith.constant 4 : index
    %c0_39 = arith.constant 0 : index
    %c0_40 = arith.constant 0 : index
    %103 = vector.load %arg7[%c4, %c0_39, %c0_40] : memref<7x128x128xbf16, #tpu.memory_space<vmem>>, vector<1x128x128xbf16>
    %104 = vector.shape_cast %103 : vector<1x128x128xbf16> to vector<128x128xbf16>
    %cst_41 = arith.constant dense<0.000000e+00> : vector<64x128xf32>
    %105 = tpu.matmul %102, %104, %cst_41 {dimension_numbers = #tpu.dot_dimension_numbers<[1], [0], [0], [1], [0, 0, 1, 1], [], []>} : vector<64x128xbf16>, vector<128x128xbf16>, vector<64x128xf32> -> vector<64x128xf32>
    %106 = vector.extract_strided_slice %0 {offsets = [5, 0], sizes = [1, 128], strides = [1, 1]} : vector<16x128xf32> to vector<1x128xf32>
    %107 = vector.broadcast %106 : vector<1x128xf32> to vector<64x128xf32>
    %108 = arith.addf %105, %107 : vector<64x128xf32>
    %cst_42 = arith.constant 0.000000e+00 : f32
    %109 = vector.broadcast %cst_42 : f32 to vector<64x128xf32>
    %110 = arith.maximumf %108, %109 : vector<64x128xf32>
    %111 = arith.truncf %110 : vector<64x128xf32> to vector<64x128xbf16>
    %c5 = arith.constant 5 : index
    %c0_43 = arith.constant 0 : index
    %c0_44 = arith.constant 0 : index
    %112 = vector.load %arg7[%c5, %c0_43, %c0_44] : memref<7x128x128xbf16, #tpu.memory_space<vmem>>, vector<1x128x128xbf16>
    %113 = vector.shape_cast %112 : vector<1x128x128xbf16> to vector<128x128xbf16>
    %cst_45 = arith.constant dense<0.000000e+00> : vector<64x128xf32>
    %114 = tpu.matmul %111, %113, %cst_45 {dimension_numbers = #tpu.dot_dimension_numbers<[1], [0], [0], [1], [0, 0, 1, 1], [], []>} : vector<64x128xbf16>, vector<128x128xbf16>, vector<64x128xf32> -> vector<64x128xf32>
    %115 = vector.extract_strided_slice %0 {offsets = [6, 0], sizes = [1, 128], strides = [1, 1]} : vector<16x128xf32> to vector<1x128xf32>
    %116 = vector.broadcast %115 : vector<1x128xf32> to vector<64x128xf32>
    %117 = arith.addf %114, %116 : vector<64x128xf32>
    %cst_46 = arith.constant 0.000000e+00 : f32
    %118 = vector.broadcast %cst_46 : f32 to vector<64x128xf32>
    %119 = arith.maximumf %117, %118 : vector<64x128xf32>
    %120 = arith.truncf %119 : vector<64x128xf32> to vector<64x128xbf16>
    %c6 = arith.constant 6 : index
    %c0_47 = arith.constant 0 : index
    %c0_48 = arith.constant 0 : index
    %121 = vector.load %arg7[%c6, %c0_47, %c0_48] : memref<7x128x128xbf16, #tpu.memory_space<vmem>>, vector<1x128x128xbf16>
    %122 = vector.shape_cast %121 : vector<1x128x128xbf16> to vector<128x128xbf16>
    %cst_49 = arith.constant dense<0.000000e+00> : vector<64x128xf32>
    %123 = tpu.matmul %120, %122, %cst_49 {dimension_numbers = #tpu.dot_dimension_numbers<[1], [0], [0], [1], [0, 0, 1, 1], [], []>} : vector<64x128xbf16>, vector<128x128xbf16>, vector<64x128xf32> -> vector<64x128xf32>
    %124 = vector.broadcast %5 : vector<1x128xf32> to vector<64x128xf32>
    %125 = arith.addf %123, %124 : vector<64x128xf32>
    %126 = vector.broadcast %59 : vector<64x1xf32> to vector<64x128xf32>
    %127 = arith.mulf %125, %126 : vector<64x128xf32>
    %c0_50 = arith.constant 0 : index
    %c0_51 = arith.constant 0 : index
    %c0_52 = arith.constant 0 : index
    %128 = vector.load %arg9[%c0_50, %c0_51, %c0_52] : memref<1x64x128xf32, #tpu.memory_space<vmem>>, vector<1x64x128xf32>
    %129 = vector.shape_cast %128 : vector<1x64x128xf32> to vector<64x128xf32>
    %130 = vector.shape_cast %127 : vector<64x128xf32> to vector<1x64x128xf32>
    tpu.vector_store %arg9[%c0_50, %c0_51, %c0_52], %130 {strides = array<i32>} : memref<1x64x128xf32, #tpu.memory_space<vmem>>, vector<1x64x128xf32>,
    return
  }
  func.func @transform_0(%arg0: i32) -> i32 {
    %c0_i32 = arith.constant 0 : i32
    %c0_i32_0 = arith.constant 0 : i32
    return %c0_i32 : i32
  }
  func.func @transform_1(%arg0: i32) -> (i32, i32, i32) {
    %c0_i32 = arith.constant 0 : i32
    %c0_i32_0 = arith.constant 0 : i32
    %c0_i32_1 = arith.constant 0 : i32
    return %arg0, %c0_i32, %c0_i32_0 : i32, i32, i32
  }
  func.func @transform_2(%arg0: i32) -> (i32, i32, i32) {
    %c0_i32 = arith.constant 0 : i32
    %c0_i32_0 = arith.constant 0 : i32
    %c0_i32_1 = arith.constant 0 : i32
    return %arg0, %c0_i32, %c0_i32_0 : i32, i32, i32
  }
  func.func @transform_3(%arg0: i32) -> (i32, i32, i32) {
    %c0_i32 = arith.constant 0 : i32
    %c0_i32_0 = arith.constant 0 : i32
    %c0_i32_1 = arith.constant 0 : i32
    return %arg0, %c0_i32, %c0_i32_0 : i32, i32, i32
  }
  func.func @transform_4(%arg0: i32) -> (i32, i32, i32) {
    %c0_i32 = arith.constant 0 : i32
    %c0_i32_0 = arith.constant 0 : i32
    %c0_i32_1 = arith.constant 0 : i32
    return %arg0, %c0_i32, %c0_i32_0 : i32, i32, i32
  }
  func.func @transform_5(%arg0: i32) -> (i32, i32) {
    %c0_i32 = arith.constant 0 : i32
    %c0_i32_0 = arith.constant 0 : i32
    %c0_i32_1 = arith.constant 0 : i32
    return %c0_i32, %c0_i32_0 : i32, i32
  }
  func.func @transform_6(%arg0: i32) -> (i32, i32, i32) {
    %c0_i32 = arith.constant 0 : i32
    %c0_i32_0 = arith.constant 0 : i32
    %c0_i32_1 = arith.constant 0 : i32
    %c0_i32_2 = arith.constant 0 : i32
    return %c0_i32, %c0_i32_0, %c0_i32_1 : i32, i32, i32
  }
  func.func @transform_7(%arg0: i32) -> (i32, i32) {
    %c0_i32 = arith.constant 0 : i32
    %c0_i32_0 = arith.constant 0 : i32
    %c0_i32_1 = arith.constant 0 : i32
    return %c0_i32, %c0_i32_0 : i32, i32
  }
  func.func @transform_8(%arg0: i32) -> (i32, i32, i32) {
    %c0_i32 = arith.constant 0 : i32
    %c0_i32_0 = arith.constant 0 : i32
    %c0_i32_1 = arith.constant 0 : i32
    return %arg0, %c0_i32, %c0_i32_0 : i32, i32, i32
  }
}

</mosaic_0001>

<llo_original>
// kernel: _lambda_.1
$region0: #{_lambda_.1}
  #allocation0 [shape = 'u32[]', space=smem, size = 0x4, offset = 0x4, fixed_abs, tag = 'smem constant byte address 0x4 - core index']
  #allocation1 [shape = 'u32[144,128]{1,0:T(1,128)}', space=vmem, size = 0x12000, scoped, tag = 'internal scratch']
  #allocation2 [shape = 'f32[1]{0:T(128)S(6)}', space=smem, size = 0x200, scoped, tag = 'scoped memory for _lambda_.1']
  %s0 = inlined_call_operand.<no memory space> [shape: f32[1], index: 0, kind: input, shape index: {}]
  %s1 = inlined_call_operand.vmem [shape: f32[2,64,3], index: 1, kind: input, shape index: {}]
  %s2 = inlined_call_operand.vmem [shape: f32[2,16,16], index: 2, kind: input, shape index: {}]
  %s3 = inlined_call_operand.vmem [shape: f32[2,4,32], index: 3, kind: input, shape index: {}]
  %s4 = inlined_call_operand.vmem [shape: f32[2,4,1], index: 4, kind: input, shape index: {}]
  %s5 = inlined_call_operand.vmem [shape: bf16[48,128], index: 5, kind: input, shape index: {}]
  %s6 = inlined_call_operand.vmem [shape: bf16[7,128,128], index: 6, kind: input, shape index: {}]
  %s7 = inlined_call_operand.vmem [shape: f32[16,128], index: 7, kind: input, shape index: {}]
  %s8 = inlined_call_operand.vmem [shape: f32[2,64,128], index: 8, kind: output, shape index: {}]
  %s9 = sld [smem:[#allocation0]]
  $region65: #{_lambda_.1} parent=0
    _
  %s11 = ssub.s32 1, %s9
  %s12 = scalar_select 0, %s11, %s9
  %13 = sst [smem:[#allocation2]] %s0
  loop: start=0, step=1, limit=4
  $region2: #{_lambda_.1} parent=0 // loop_pre_header
    _
  $region3: #{_lambda_.1} parent=0 // loop_header
    %s15 = sphi 0, %s19
    %p16 = scmp.ge.s32.totalorder %s15, 4
    %s23 = sphi 0, %s23
    %s25 = sphi 0, %s23
    %s26 = sphi 0, %s25
    %s40 = sphi 0, %s26
    %s46 = sphi 0, %s48
    %s49 = sphi 0, %s46
    %s50 = sphi 0, %s49
    %s66 = sphi 0, %s50
    %s72 = sphi 0, %s74
    %s75 = sphi 0, %s72
    %s76 = sphi 0, %s75
    %s92 = sphi 0, %s76
    %s98 = sphi 0, %s100
    %s101 = sphi 0, %s98
    %s102 = sphi 0, %s101
    %s118 = sphi 0, %s102
    %s124 = sphi 0, %s126
    %s127 = sphi 0, %s124
    %s128 = sphi 0, %s127
    %s144 = sphi 0, %s128
    %s148 = sphi 0, %s148
    %s150 = sphi 0, %s148
    %s151 = sphi 0, %s150
    %s165 = sphi 0, %s151
    %s169 = sphi 0, %s169
    %s171 = sphi 0, %s169
    %s172 = sphi 0, %s171
    %s186 = sphi 0, %s172
    %s190 = sphi 0, %s190
    %s192 = sphi 0, %s190
    %s193 = sphi 0, %s192
    %s207 = sphi 0, %s193
    %s213 = sphi 0, %s215
    %s216 = sphi 0, %s213
    %s217 = sphi 0, %s216
    %s233 = sphi 0, %s217
  $region4: #{_lambda_.1} parent=0 // loop_header_branch
    %18 = sbr.rel (%p16) target = $region8
  $region5: #{_lambda_.1} parent=0 // loop_body
    %s20 = ssub.s32 %s15, 1
    %s21 = ssub.s32 %s15, 2
    %s22 = sadd.s32 %s15, 1
    %s24 = sadd.s32 %s23, 1
    %p27 = scmp.eq.s32.totalorder %s15, 1
    %p28 = scmp.ne.s32.totalorder %s23, %s25
    %p29 = scmp.eq.s32.totalorder %s15, 0
    %p30 = por %p28, %p29
    %p31 = scmp.ne.s32.totalorder %s23, %s25
    %p32 = scmp.eq.s32.totalorder %s20, 1
    %p33 = por %p31, %p32
    %p34 = scmp.ne.s32.totalorder %s25, %s26
    %p35 = scmp.eq.s32.totalorder %s20, 0
    %p36 = por %p34, %p35
    %p37 = scmp.ne.s32.totalorder %s25, %s26
    %p38 = scmp.eq.s32.totalorder %s21, 1
    %p39 = por %p37, %p38
    %p41 = scmp.ne.s32.totalorder %s26, %s40
    %p42 = scmp.eq.s32.totalorder %s21, 0
    %p43 = por %p41, %p42
    %s44 = ssub.s32 %s15, %s22
    %p45 = scmp.eq.s32.totalorder %s44, 0
    %s47 = sadd.s32 %s46, 1
    %s48 = scalar_select %p45, %s46, %s47
    %p51 = pneg %p45
    %p52 = scmp.eq.s32.totalorder %s15, 1
    %p53 = por %p51, %p52
    %p54 = scmp.ne.s32.totalorder %s46, %s49
    %p55 = scmp.eq.s32.totalorder %s15, 0
    %p56 = por %p54, %p55
    %p57 = scmp.ne.s32.totalorder %s46, %s49
    %p58 = scmp.eq.s32.totalorder %s20, 1
    %p59 = por %p57, %p58
    %p60 = scmp.ne.s32.totalorder %s49, %s50
    %p61 = scmp.eq.s32.totalorder %s20, 0
    %p62 = por %p60, %p61
    %p63 = scmp.ne.s32.totalorder %s49, %s50
    %p64 = scmp.eq.s32.totalorder %s21, 1
    %p65 = por %p63, %p64
    %p67 = scmp.ne.s32.totalorder %s50, %s66
    %p68 = scmp.eq.s32.totalorder %s21, 0
    %p69 = por %p67, %p68
    %s70 = ssub.s32 %s15, %s22
    %p71 = scmp.eq.s32.totalorder %s70, 0
    %s73 = sadd.s32 %s72, 1
    %s74 = scalar_select %p71, %s72, %s73
    %p77 = pneg %p71
    %p78 = scmp.eq.s32.totalorder %s15, 1
    %p79 = por %p77, %p78
    %p80 = scmp.ne.s32.totalorder %s72, %s75
    %p81 = scmp.eq.s32.totalorder %s15, 0
    %p82 = por %p80, %p81
    %p83 = scmp.ne.s32.totalorder %s72, %s75
    %p84 = scmp.eq.s32.totalorder %s20, 1
    %p85 = por %p83, %p84
    %p86 = scmp.ne.s32.totalorder %s75, %s76
    %p87 = scmp.eq.s32.totalorder %s20, 0
    %p88 = por %p86, %p87
    %p89 = scmp.ne.s32.totalorder %s75, %s76
    %p90 = scmp.eq.s32.totalorder %s21, 1
    %p91 = por %p89, %p90
    %p93 = scmp.ne.s32.totalorder %s76, %s92
    %p94 = scmp.eq.s32.totalorder %s21, 0
    %p95 = por %p93, %p94
    %s96 = ssub.s32 %s15, %s22
    %p97 = scmp.eq.s32.totalorder %s96, 0
    %s99 = sadd.s32 %s98, 1
    %s100 = scalar_select %p97, %s98, %s99
    %p103 = pneg %p97
    %p104 = scmp.eq.s32.totalorder %s15, 1
    %p105 = por %p103, %p104
    %p106 = scmp.ne.s32.totalorder %s98, %s101
    %p107 = scmp.eq.s32.totalorder %s15, 0
    %p108 = por %p106, %p107
    %p109 = scmp.ne.s32.totalorder %s98, %s101
    %p110 = scmp.eq.s32.totalorder %s20, 1
    %p111 = por %p109, %p110
    %p112 = scmp.ne.s32.totalorder %s101, %s102
    %p113 = scmp.eq.s32.totalorder %s20, 0
    %p114 = por %p112, %p113
    %p115 = scmp.ne.s32.totalorder %s101, %s102
    %p116 = scmp.eq.s32.totalorder %s21, 1
    %p117 = por %p115, %p116
    %p119 = scmp.ne.s32.totalorder %s102, %s118
    %p120 = scmp.eq.s32.totalorder %s21, 0
    %p121 = por %p119, %p120
    %s122 = ssub.s32 %s15, %s22
    %p123 = scmp.eq.s32.totalorder %s122, 0
    %s125 = sadd.s32 %s124, 1
    %s126 = scalar_select %p123, %s124, %s125
    %p129 = pneg %p123
    %p130 = scmp.eq.s32.totalorder %s15, 1
    %p131 = por %p129, %p130
    %p132 = scmp.ne.s32.totalorder %s124, %s127
    %p133 = scmp.eq.s32.totalorder %s15, 0
    %p134 = por %p132, %p133
    %p135 = scmp.ne.s32.totalorder %s124, %s127
    %p136 = scmp.eq.s32.totalorder %s20, 1
    %p137 = por %p135, %p136
    %p138 = scmp.ne.s32.totalorder %s127, %s128
    %p139 = scmp.eq.s32.totalorder %s20, 0
    %p140 = por %p138, %p139
    %p141 = scmp.ne.s32.totalorder %s127, %s128
    %p142 = scmp.eq.s32.totalorder %s21, 1
    %p143 = por %p141, %p142
    %p145 = scmp.ne.s32.totalorder %s128, %s144
    %p146 = scmp.eq.s32.totalorder %s21, 0
    %p147 = por %p145, %p146
    %s149 = sadd.s32 %s148, 1
    %p152 = scmp.eq.s32.totalorder %s15, 1
    %p153 = scmp.ne.s32.totalorder %s148, %s150
    %p154 = scmp.eq.s32.totalorder %s15, 0
    %p155 = por %p153, %p154
    %p156 = scmp.ne.s32.totalorder %s148, %s150
    %p157 = scmp.eq.s32.totalorder %s20, 1
    %p158 = por %p156, %p157
    %p159 = scmp.ne.s32.totalorder %s150, %s151
    %p160 = scmp.eq.s32.totalorder %s20, 0
    %p161 = por %p159, %p160
    %p162 = scmp.ne.s32.totalorder %s150, %s151
    %p163 = scmp.eq.s32.totalorder %s21, 1
    %p164 = por %p162, %p163
    %p166 = scmp.ne.s32.totalorder %s151, %s165
    %p167 = scmp.eq.s32.totalorder %s21, 0
    %p168 = por %p166, %p167
    %s170 = sadd.s32 %s169, 1
    %p173 = scmp.eq.s32.totalorder %s15, 1
    %p174 = scmp.ne.s32.totalorder %s169, %s171
    %p175 = scmp.eq.s32.totalorder %s15, 0
    %p176 = por %p174, %p175
    %p177 = scmp.ne.s32.totalorder %s169, %s171
    %p178 = scmp.eq.s32.totalorder %s20, 1
    %p179 = por %p177, %p178
    %p180 = scmp.ne.s32.totalorder %s171, %s172
    %p181 = scmp.eq.s32.totalorder %s20, 0
    %p182 = por %p180, %p181
    %p183 = scmp.ne.s32.totalorder %s171, %s172
    %p184 = scmp.eq.s32.totalorder %s21, 1
    %p185 = por %p183, %p184
    %p187 = scmp.ne.s32.totalorder %s172, %s186
    %p188 = scmp.eq.s32.totalorder %s21, 0
    %p189 = por %p187, %p188
    %s191 = sadd.s32 %s190, 1
    %p194 = scmp.eq.s32.totalorder %s15, 1
    %p195 = scmp.ne.s32.totalorder %s190, %s192
    %p196 = scmp.eq.s32.totalorder %s15, 0
    %p197 = por %p195, %p196
    %p198 = scmp.ne.s32.totalorder %s190, %s192
    %p199 = scmp.eq.s32.totalorder %s20, 1
    %p200 = por %p198, %p199
    %p201 = scmp.ne.s32.totalorder %s192, %s193
    %p202 = scmp.eq.s32.totalorder %s20, 0
    %p203 = por %p201, %p202
    %p204 = scmp.ne.s32.totalorder %s192, %s193
    %p205 = scmp.eq.s32.totalorder %s21, 1
    %p206 = por %p204, %p205
    %p208 = scmp.ne.s32.totalorder %s193, %s207
    %p209 = scmp.eq.s32.totalorder %s21, 0
    %p210 = por %p208, %p209
    %s211 = ssub.s32 %s15, %s22
    %p212 = scmp.eq.s32.totalorder %s211, 0
    %s214 = sadd.s32 %s213, 1
    %s215 = scalar_select %p212, %s213, %s214
    %p218 = pneg %p212
    %p219 = scmp.eq.s32.totalorder %s15, 1
    %p220 = por %p218, %p219
    %p221 = scmp.ne.s32.totalorder %s213, %s216
    %p222 = scmp.eq.s32.totalorder %s15, 0
    %p223 = por %p221, %p222
    %p224 = scmp.ne.s32.totalorder %s213, %s216
    %p225 = scmp.eq.s32.totalorder %s20, 1
    %p226 = por %p224, %p225
    %p227 = scmp.ne.s32.totalorder %s216, %s217
    %p228 = scmp.eq.s32.totalorder %s20, 0
    %p229 = por %p227, %p228
    %p230 = scmp.ne.s32.totalorder %s216, %s217
    %p231 = scmp.eq.s32.totalorder %s21, 1
    %p232 = por %p230, %p231
    %p234 = scmp.ne.s32.totalorder %s217, %s233
    %p235 = scmp.eq.s32.totalorder %s21, 0
    %p236 = por %p234, %p235
    %p237 = scmp.le.s32.totalorder 1, %s15
    %p238 = scmp.lt.s32.totalorder %s15, 3
    %p239 = pnand %p237, %p238
    %p240 = pneg %p239
    // Predicated region
    $region9: #{_lambda_.1} parent=5 // pred_check
      _
    $region10: #{_lambda_.1} parent=5 // pred_check_branch
      %242 = sbr.rel (%p239) target = $region12
    $region11: #{_lambda_.1} parent=5 // pred_region
      %s243 = ssub.s32 %s15, 1
      // Predicated region
      $region13: #{_lambda_.1} parent=11 // pred_check
        %p244 = pneg %p36
      $region14: #{_lambda_.1} parent=11 // pred_check_branch
        %246 = sbr.rel (%p244) target = $region16
      $region15: #{_lambda_.1} parent=11 // pred_region
        _
      $region16: #{_lambda_.1} parent=11 // pred_fallthru
        _
      // Predicated region
      $region17: #{_lambda_.1} parent=11 // pred_check
        %p247 = pneg %p161
      $region18: #{_lambda_.1} parent=11 // pred_check_branch
        %249 = sbr.rel (%p247) target = $region20
      $region19: #{_lambda_.1} parent=11 // pred_region
        _
      $region20: #{_lambda_.1} parent=11 // pred_fallthru
        _
      // Predicated region
      $region21: #{_lambda_.1} parent=11 // pred_check
        %p250 = pneg %p182
      $region22: #{_lambda_.1} parent=11 // pred_check_branch
        %252 = sbr.rel (%p250) target = $region24
      $region23: #{_lambda_.1} parent=11 // pred_region
        _
      $region24: #{_lambda_.1} parent=11 // pred_fallthru
        _
      // Predicated region
      $region25: #{_lambda_.1} parent=11 // pred_check
        %p253 = pneg %p203
      $region26: #{_lambda_.1} parent=11 // pred_check_branch
        %255 = sbr.rel (%p253) target = $region28
      $region27: #{_lambda_.1} parent=11 // pred_region
        _
      $region28: #{_lambda_.1} parent=11 // pred_fallthru
        _
    $region12: #{_lambda_.1} parent=5 // pred_fallthru
      _
    %p256 = scmp.lt.s32.totalorder %s15, 2
    // Predicated region
    $region29: #{_lambda_.1} parent=5 // pred_check
      %p257 = pneg %p256
    $region30: #{_lambda_.1} parent=5 // pred_check_branch
      %259 = sbr.rel (%p257) target = $region32
    $region31: #{_lambda_.1} parent=5 // pred_region
      // Predicated region
      $region33: #{_lambda_.1} parent=31 // pred_check
        %p260 = pneg %p56
      $region34: #{_lambda_.1} parent=31 // pred_check_branch
        %262 = sbr.rel (%p260) target = $region36
      $region35: #{_lambda_.1} parent=31 // pred_region
        %p263 = scmp.lt.s32.totalorder %s15, 1
        %s264 = scalar_select %p263, %s15, 1
        %s265 = smul.addr %s264, 8
        %s266 = smul.addr %s265, 8
        %s267 = scalar_lea.vmem %s1, %s266
      $region36: #{_lambda_.1} parent=31 // pred_fallthru
        _
      // Predicated region
      $region37: #{_lambda_.1} parent=31 // pred_check
        %p268 = pneg %p82
      $region38: #{_lambda_.1} parent=31 // pred_check_branch
        %270 = sbr.rel (%p268) target = $region40
      $region39: #{_lambda_.1} parent=31 // pred_region
        %p271 = scmp.lt.s32.totalorder %s15, 1
        %s272 = scalar_select %p271, %s15, 1
        %s273 = smul.addr %s272, 2
        %s274 = smul.addr %s273, 8
        %s275 = scalar_lea.vmem %s2, %s274
      $region40: #{_lambda_.1} parent=31 // pred_fallthru
        _
      // Predicated region
      $region41: #{_lambda_.1} parent=31 // pred_check
        %p276 = pneg %p108
      $region42: #{_lambda_.1} parent=31 // pred_check_branch
        %278 = sbr.rel (%p276) target = $region44
      $region43: #{_lambda_.1} parent=31 // pred_region
        %p279 = scmp.lt.s32.totalorder %s15, 1
        %s280 = scalar_select %p279, %s15, 1
        %s281 = smul.addr %s280, 4
        %s282 = scalar_lea.vmem %s3, %s281
      $region44: #{_lambda_.1} parent=31 // pred_fallthru
        _
      // Predicated region
      $region45: #{_lambda_.1} parent=31 // pred_check
        %p283 = pneg %p134
      $region46: #{_lambda_.1} parent=31 // pred_check_branch
        %285 = sbr.rel (%p283) target = $region48
      $region47: #{_lambda_.1} parent=31 // pred_region
        %p286 = scmp.lt.s32.totalorder %s15, 1
        %s287 = scalar_select %p286, %s15, 1
        %s288 = smul.addr %s287, 4
        %s289 = scalar_lea.vmem %s4, %s288
      $region48: #{_lambda_.1} parent=31 // pred_fallthru
        _
    $region32: #{_lambda_.1} parent=5 // pred_fallthru
      _
    %p290 = scmp.le.s32.totalorder 1, %s15
    %p291 = scmp.lt.s32.totalorder %s15, 3
    %p292 = pnand %p290, %p291
    %p293 = pneg %p292
    // Predicated region
    $region49: #{_lambda_.1} parent=5 // pred_check
      _
    $region50: #{_lambda_.1} parent=5 // pred_check_branch
      %295 = sbr.rel (%p292) target = $region52
    $region51: #{_lambda_.1} parent=5 // pred_region
      %s296 = ssub.s32 %s15, 1
      %p297 = pneg %p36
      %p298 = pneg %p33
      %p299 = scmp.lt.s32.totalorder %s20, 1
      %s300 = scalar_select %p299, %s20, 1
      %s301 = smul.addr %s300, 8
      %s302 = smul.addr %s301, 8
      %s303 = scalar_lea.vmem %s1, %s302
      %p304 = pneg %p62
      %p305 = pneg %p59
      %p306 = scmp.lt.s32.totalorder %s20, 1
      %s307 = scalar_select %p306, %s20, 1
      %s308 = smul.addr %s307, 2
      %s309 = smul.addr %s308, 8
      %s310 = scalar_lea.vmem %s2, %s309
      %p311 = pneg %p88
      %p312 = pneg %p85
      %p313 = scmp.lt.s32.totalorder %s20, 1
      %s314 = scalar_select %p313, %s20, 1
      %s315 = smul.addr %s314, 4
      %s316 = scalar_lea.vmem %s3, %s315
      %p317 = pneg %p114
      %p318 = pneg %p111
      %p319 = scmp.lt.s32.totalorder %s20, 1
      %s320 = scalar_select %p319, %s20, 1
      %s321 = smul.addr %s320, 4
      %s322 = scalar_lea.vmem %s4, %s321
      %p323 = pneg %p140
      %p324 = pneg %p137
      %p325 = pneg %p161
      %p326 = pneg %p158
      %p327 = pneg %p182
      %p328 = pneg %p179
      %p329 = pneg %p203
      %p330 = pneg %p200
      %p331 = pneg %p229
      %p332 = pneg %p226
      %p333 = scmp.lt.s32.totalorder %s20, 1
      %s334 = scalar_select %p333, %s20, 1
      %s335 = smul.addr %s334, 8
      %s336 = smul.addr %s335, 8
      %s337 = scalar_lea.vmem %s8, %s336
      %p338 = scmp.lt.s32.totalorder %s20, 1
      %s339 = scalar_select %p338, %s20, 1
      %s340 = smul.addr %s339, 8
      %s341 = smul.addr %s340, 8
      %s342 = scalar_lea.vmem %s1, %s341
      %p343 = scmp.lt.s32.totalorder %s20, 1
      %s344 = scalar_select %p343, %s20, 1
      %s345 = smul.addr %s344, 2
      %s346 = smul.addr %s345, 8
      %s347 = scalar_lea.vmem %s2, %s346
      %p348 = scmp.lt.s32.totalorder %s20, 1
      %s349 = scalar_select %p348, %s20, 1
      %s350 = smul.addr %s349, 4
      %s351 = scalar_lea.vmem %s3, %s350
      %p352 = scmp.lt.s32.totalorder %s20, 1
      %s353 = scalar_select %p352, %s20, 1
      %s354 = smul.addr %s353, 4
      %s355 = scalar_lea.vmem %s4, %s354
      %p356 = scmp.lt.s32.totalorder %s20, 1
      %s357 = scalar_select %p356, %s20, 1
      %s358 = smul.addr %s357, 8
      %s359 = smul.addr %s358, 8
      %s360 = scalar_lea.vmem %s8, %s359
      %v362 = vld [vmem:[%s7] sm:$0xff]
      %v363 = vld [vmem:[%s7 + $0x8] sm:$0xff]
      %v364 = vld [vmem:[%s347] sm:$0xff]
      %v365 = vld [vmem:[%s347 + $0x8] sm:$0xff]
      %vm366 = vcmask 130048
      %v367 = vsel %vm366, %v364, 0.0
      %v368 = vsel %vm366, %v365, 0.0
      %v369 = vadd.f32 %v367, %v368
      %v370 = vrot.slane %v369, 4
      %v371 = vadd.f32 %v369, %v370
      %v372 = vrot.slane %v371, 2
      %v373 = vadd.f32 %v371, %v372
      %v374 = vrot.slane %v373, 1
      %v375 = vadd.f32 %v373, %v374
      %v376 = vrcp.pop 16.0
      %v377 = vmul.f32 %v375, %v376
      %v378 = vpack.c.bf16 %v377, %v377
      %v379 = vld [vmem:[%s5] sm:$0xf]
      %v380 = vld [vmem:[%s5 + $0x4] sm:$0xf]
      %v383 = vunpack.c.l.b16 %v379
      %v384 = vunpack.c.l.b16 %v380
      %v385 = vpack.c.b16 %v384, %v383
      %v388 = vsel %vm366, %v378, 0
      %390 = vmatprep.subr.bf16.mxu0 0
      %391 = vmatpush1.bf16.msra.mxu0 0
      %392 = vmatprep.subr.bf16.mxu0 0
      %393 = vmatpush1.bf16.msra.mxu0 0
      %394 = vmatprep.subr.bf16.mxu0 0
      %395 = vmatpush1.bf16.msra.mxu0 0
      %396 = vmatprep.subr.bf16.mxu0 0
      %397 = vmatpush1.bf16.msra.mxu0 0
      %398 = vmatprep.subr.bf16.mxu0 0
      %399 = vmatpush1.bf16.msra.mxu0 0
      %400 = vmatprep.subr.bf16.mxu0 0
      %401 = vmatpush1.bf16.msra.mxu0 0
      %402 = vmatprep.subr.bf16.mxu0 0
      %403 = vmatpush1.bf16.msra.mxu0 0
      %404 = vmatprep.subr.bf16.mxu0 0
      %405 = vmatpush1.bf16.msra.mxu0 %v385
      %406 = vmatprep.subr.bf16.mxu0 0
      %407 = vmatpush2.bf16.msra.mxu0 0
      %408 = vmatprep.subr.bf16.mxu0 0
      %409 = vmatpush2.bf16.msra.mxu0 0
      %410 = vmatprep.subr.bf16.mxu0 0
      %411 = vmatpush2.bf16.msra.mxu0 0
      %412 = vmatprep.subr.bf16.mxu0 0
      %413 = vmatpush2.bf16.msra.mxu0 0
      %414 = vmatprep.subr.bf16.mxu0 0
      %415 = vmatpush2.bf16.msra.mxu0 0
      %416 = vmatprep.subr.bf16.mxu0 0
      %417 = vmatpush2.bf16.msra.mxu0 0
      %418 = vmatprep.subr.bf16.mxu0 0
      %419 = vmatpush2.bf16.msra.mxu0 0
      %420 = vmatprep.subr.bf16.mxu0 0
      %421 = vmatpush2.bf16.msra.mxu0 0
      %422 = vmatprep.mubr.bf16.mxu0 0
      %423 = vmatmul.mubr.bf16.gmra.mxu0 %v388
      %v424 = vpop.f32.mrf.mxu0
      %v425 = vadd.f32 %v362, %v424
      %v426 = vpop.f32.mrf.mxu0
      %v427 = vpop.f32.mrf.mxu0
      %v428 = vpop.f32.mrf.mxu0
      %429 = vdwg.mxu0
      %v430 = vld [vmem:[%s355] sm:$0xf]
      %vm431 = vcmask 3072
      %v432 = vsel %vm431, %v430, 0.0
      %v433 = vrot.slane %v432, 4
      %v434 = vadd.f32 %v432, %v433
      %v435 = vrot.slane %v434, 2
      %v436 = vadd.f32 %v434, %v435
      %v437 = vrot.slane %v436, 1
      %v438 = vadd.f32 %v436, %v437
      %v439 = vadd.f32 %v438, 1e-06
      %v440 = vld [vmem:[%s351] sm:$0xf]
      %v441 = vrcp.pop %v439
      %v442 = vmul.f32 %v430, %v441
      %444 = vset.pattern.permute.xlu0 0
      %445 = vperm.xlu0 %444, %v442
      %v446 = vpop.permute.xlu0 %445
      %v448 = vmul.f32 %v440, %v446
      %vm449 = vcmask 257024
      %v450 = vsel %vm449, %v448, 0.0
      %v451 = vrot.slane %v450, 4
      %v452 = vadd.f32 %v450, %v451
      %v453 = vrot.slane %v452, 2
      %v454 = vadd.f32 %v452, %v453
      %v455 = vrot.slane %v454, 1
      %v456 = vadd.f32 %v454, %v455
      %v457 = vpack.c.bf16 %v456, %v456
      %v458 = vld [vmem:[%s5 + $0x8] sm:$0xf]
      %v459 = vld [vmem:[%s5 + $0xc] sm:$0xf]
      %v460 = vld [vmem:[%s5 + $0x10] sm:$0xf]
      %v461 = vld [vmem:[%s5 + $0x14] sm:$0xf]
      %v462 = vmul.f32 %v438, %v441
      %464 = vset.pattern.permute.xlu0 0
      %465 = vperm.xlu0 %464, %v462
      %v466 = vpop.permute.xlu0 %465
      %v468 = vmul.f32 %v362, %v466
      %v473 = vunpack.c.l.b16 %v458
      %v474 = vunpack.c.l.b16 %v459
      %v475 = vunpack.c.l.b16 %v460
      %v476 = vunpack.c.l.b16 %v461
      %v477 = vpack.c.b16 %v474, %v473
      %v478 = vpack.c.b16 %v476, %v475
      %v482 = vrot.slane %v468, 1
      %vm484 = vcmask 261120
      %v486 = vsel %vm484, %v457, 0
      %488 = vmatprep.subr.bf16.mxu0 0
      %489 = vmatpush1.bf16.msra.mxu0 0
      %490 = vmatprep.subr.bf16.mxu0 0
      %491 = vmatpush1.bf16.msra.mxu0 0
      %492 = vmatprep.subr.bf16.mxu0 0
      %493 = vmatpush1.bf16.msra.mxu0 0
      %494 = vmatprep.subr.bf16.mxu0 0
      %495 = vmatpush1.bf16.msra.mxu0 0
      %496 = vmatprep.subr.bf16.mxu0 0
      %497 = vmatpush1.bf16.msra.mxu0 0
      %498 = vmatprep.subr.bf16.mxu0 0
      %499 = vmatpush1.bf16.msra.mxu0 0
      %500 = vmatprep.subr.bf16.mxu0 0
      %501 = vmatpush1.bf16.msra.mxu0 %v478
      %502 = vmatprep.subr.bf16.mxu0 0
      %503 = vmatpush1.bf16.msra.mxu0 %v477
      %504 = vmatprep.subr.bf16.mxu0 0
      %505 = vmatpush2.bf16.msra.mxu0 0
      %506 = vmatprep.subr.bf16.mxu0 0
      %507 = vmatpush2.bf16.msra.mxu0 0
      %508 = vmatprep.subr.bf16.mxu0 0
      %509 = vmatpush2.bf16.msra.mxu0 0
      %510 = vmatprep.subr.bf16.mxu0 0
      %511 = vmatpush2.bf16.msra.mxu0 0
      %512 = vmatprep.subr.bf16.mxu0 0
      %513 = vmatpush2.bf16.msra.mxu0 0
      %514 = vmatprep.subr.bf16.mxu0 0
      %515 = vmatpush2.bf16.msra.mxu0 0
      %516 = vmatprep.subr.bf16.mxu0 0
      %517 = vmatpush2.bf16.msra.mxu0 0
      %518 = vmatprep.subr.bf16.mxu0 0
      %519 = vmatpush2.bf16.msra.mxu0 0
      %520 = vmatprep.mubr.bf16.mxu0 0
      %521 = vmatmul.mubr.bf16.gmra.mxu0 %v486
      %v522 = vpop.f32.mrf.mxu0
      %v523 = vadd.f32 %v482, %v522
      %v524 = vpop.f32.mrf.mxu0
      %v525 = vpop.f32.mrf.mxu0
      %v526 = vpop.f32.mrf.mxu0
      %527 = vdwg.mxu0
      %v528 = vadd.f32 %v425, %v523
      %v529 = vmax.f32 %v528, 0.0
      %v530 = vpack.c.bf16 %v529, %v529
      %v531 = vld [vmem:[%s6] sm:$0xf]
      %v532 = vld [vmem:[%s6 + $0x4] sm:$0xf]
      %v533 = vld [vmem:[%s6 + $0x8] sm:$0xf]
      %v534 = vld [vmem:[%s6 + $0xc] sm:$0xf]
      %v535 = vld [vmem:[%s6 + $0x10] sm:$0xf]
      %v536 = vld [vmem:[%s6 + $0x14] sm:$0xf]
      %v537 = vld [vmem:[%s6 + $0x18] sm:$0xf]
      %v538 = vld [vmem:[%s6 + $0x1c] sm:$0xf]
      %v539 = vld [vmem:[%s6 + $0x20] sm:$0xf]
      %v540 = vld [vmem:[%s6 + $0x24] sm:$0xf]
      %v541 = vld [vmem:[%s6 + $0x28] sm:$0xf]
      %v542 = vld [vmem:[%s6 + $0x2c] sm:$0xf]
      %v543 = vld [vmem:[%s6 + $0x30] sm:$0xf]
      %v544 = vld [vmem:[%s6 + $0x34] sm:$0xf]
      %v545 = vld [vmem:[%s6 + $0x38] sm:$0xf]
      %v546 = vld [vmem:[%s6 + $0x3c] sm:$0xf]
      %v563 = vunpack.c.l.b16 %v531
      %v564 = vunpack.c.l.b16 %v532
      %v565 = vunpack.c.l.b16 %v533
      %v566 = vunpack.c.l.b16 %v534
      %v567 = vunpack.c.l.b16 %v535
      %v568 = vunpack.c.l.b16 %v536
      %v569 = vunpack.c.l.b16 %v537
      %v570 = vunpack.c.l.b16 %v538
      %v571 = vunpack.c.l.b16 %v539
      %v572 = vunpack.c.l.b16 %v540
      %v573 = vunpack.c.l.b16 %v541
      %v574 = vunpack.c.l.b16 %v542
      %v575 = vunpack.c.l.b16 %v543
      %v576 = vunpack.c.l.b16 %v544
      %v577 = vunpack.c.l.b16 %v545
      %v578 = vunpack.c.l.b16 %v546
      %v579 = vpack.c.b16 %v564, %v563
      %v580 = vpack.c.b16 %v566, %v565
      %v581 = vpack.c.b16 %v568, %v567
      %v582 = vpack.c.b16 %v570, %v569
      %v583 = vpack.c.b16 %v572, %v571
      %v584 = vpack.c.b16 %v574, %v573
      %v585 = vpack.c.b16 %v576, %v575
      %v586 = vpack.c.b16 %v578, %v577
      %v596 = vrot.slane %v362, 2
      %598 = vmatprep.subr.bf16.mxu0 0
      %599 = vmatpush1.bf16.msra.mxu0 %v586
      %600 = vmatprep.subr.bf16.mxu0 0
      %601 = vmatpush1.bf16.msra.mxu0 %v585
      %602 = vmatprep.subr.bf16.mxu0 0
      %603 = vmatpush1.bf16.msra.mxu0 %v584
      %604 = vmatprep.subr.bf16.mxu0 0
      %605 = vmatpush1.bf16.msra.mxu0 %v583
      %606 = vmatprep.subr.bf16.mxu0 0
      %607 = vmatpush1.bf16.msra.mxu0 %v582
      %608 = vmatprep.subr.bf16.mxu0 0
      %609 = vmatpush1.bf16.msra.mxu0 %v581
      %610 = vmatprep.subr.bf16.mxu0 0
      %611 = vmatpush1.bf16.msra.mxu0 %v580
      %612 = vmatprep.subr.bf16.mxu0 0
      %613 = vmatpush1.bf16.msra.mxu0 %v579
      %614 = vmatprep.subr.bf16.mxu0 0
      %615 = vmatpush2.bf16.msra.mxu0 0
      %616 = vmatprep.subr.bf16.mxu0 0
      %617 = vmatpush2.bf16.msra.mxu0 0
      %618 = vmatprep.subr.bf16.mxu0 0
      %619 = vmatpush2.bf16.msra.mxu0 0
      %620 = vmatprep.subr.bf16.mxu0 0
      %621 = vmatpush2.bf16.msra.mxu0 0
      %622 = vmatprep.subr.bf16.mxu0 0
      %623 = vmatpush2.bf16.msra.mxu0 0
      %624 = vmatprep.subr.bf16.mxu0 0
      %625 = vmatpush2.bf16.msra.mxu0 0
      %626 = vmatprep.subr.bf16.mxu0 0
      %627 = vmatpush2.bf16.msra.mxu0 0
      %628 = vmatprep.subr.bf16.mxu0 0
      %629 = vmatpush2.bf16.msra.mxu0 0
      %630 = vmatprep.mubr.bf16.mxu0 0
      %631 = vmatmul.mubr.bf16.gmra.mxu0 %v530
      %v632 = vpop.f32.mrf.mxu0
      %v633 = vadd.f32 %v596, %v632
      %v634 = vpop.f32.mrf.mxu0
      %v635 = vpop.f32.mrf.mxu0
      %v636 = vpop.f32.mrf.mxu0
      %637 = vdwg.mxu0
      %v638 = vpack.c.bf16 %v633, %v633
      %s639 = scalar_lea.vmem %s6, 64
      %v640 = vld [vmem:[%s639] sm:$0xf]
      %v641 = vld [vmem:[%s639 + $0x4] sm:$0xf]
      %v642 = vld [vmem:[%s639 + $0x8] sm:$0xf]
      %v643 = vld [vmem:[%s639 + $0xc] sm:$0xf]
      %v644 = vld [vmem:[%s639 + $0x10] sm:$0xf]
      %v645 = vld [vmem:[%s639 + $0x14] sm:$0xf]
      %v646 = vld [vmem:[%s639 + $0x18] sm:$0xf]
      %v647 = vld [vmem:[%s639 + $0x1c] sm:$0xf]
      %v648 = vld [vmem:[%s639 + $0x20] sm:$0xf]
      %v649 = vld [vmem:[%s639 + $0x24] sm:$0xf]
      %v650 = vld [vmem:[%s639 + $0x28] sm:$0xf]
      %v651 = vld [vmem:[%s639 + $0x2c] sm:$0xf]
      %v652 = vld [vmem:[%s639 + $0x30] sm:$0xf]
      %v653 = vld [vmem:[%s639 + $0x34] sm:$0xf]
      %v654 = vld [vmem:[%s639 + $0x38] sm:$0xf]
      %v655 = vld [vmem:[%s639 + $0x3c] sm:$0xf]
      %v672 = vunpack.c.l.b16 %v640
      %v673 = vunpack.c.l.b16 %v641
      %v674 = vunpack.c.l.b16 %v642
      %v675 = vunpack.c.l.b16 %v643
      %v676 = vunpack.c.l.b16 %v644
      %v677 = vunpack.c.l.b16 %v645
      %v678 = vunpack.c.l.b16 %v646
      %v679 = vunpack.c.l.b16 %v647
      %v680 = vunpack.c.l.b16 %v648
      %v681 = vunpack.c.l.b16 %v649
      %v682 = vunpack.c.l.b16 %v650
      %v683 = vunpack.c.l.b16 %v651
      %v684 = vunpack.c.l.b16 %v652
      %v685 = vunpack.c.l.b16 %v653
      %v686 = vunpack.c.l.b16 %v654
      %v687 = vunpack.c.l.b16 %v655
      %v688 = vpack.c.b16 %v673, %v672
      %v689 = vpack.c.b16 %v675, %v674
      %v690 = vpack.c.b16 %v677, %v676
      %v691 = vpack.c.b16 %v679, %v678
      %v692 = vpack.c.b16 %v681, %v680
      %v693 = vpack.c.b16 %v683, %v682
      %v694 = vpack.c.b16 %v685, %v684
      %v695 = vpack.c.b16 %v687, %v686
      %704 = vmatprep.subr.bf16.mxu0 0
      %705 = vmatpush1.bf16.msra.mxu0 %v695
      %706 = vmatprep.subr.bf16.mxu0 0
      %707 = vmatpush1.bf16.msra.mxu0 %v694
      %708 = vmatprep.subr.bf16.mxu0 0
      %709 = vmatpush1.bf16.msra.mxu0 %v693
      %710 = vmatprep.subr.bf16.mxu0 0
      %711 = vmatpush1.bf16.msra.mxu0 %v692
      %712 = vmatprep.subr.bf16.mxu0 0
      %713 = vmatpush1.bf16.msra.mxu0 %v691
      %714 = vmatprep.subr.bf16.mxu0 0
      %715 = vmatpush1.bf16.msra.mxu0 %v690
      %716 = vmatprep.subr.bf16.mxu0 0
      %717 = vmatpush1.bf16.msra.mxu0 %v689
      %718 = vmatprep.subr.bf16.mxu0 0
      %719 = vmatpush1.bf16.msra.mxu0 %v688
      %720 = vmatprep.subr.bf16.mxu0 0
      %721 = vmatpush2.bf16.msra.mxu0 0
      %722 = vmatprep.subr.bf16.mxu0 0
      %723 = vmatpush2.bf16.msra.mxu0 0
      %724 = vmatprep.subr.bf16.mxu0 0
      %725 = vmatpush2.bf16.msra.mxu0 0
      %726 = vmatprep.subr.bf16.mxu0 0
      %727 = vmatpush2.bf16.msra.mxu0 0
      %728 = vmatprep.subr.bf16.mxu0 0
      %729 = vmatpush2.bf16.msra.mxu0 0
      %730 = vmatprep.subr.bf16.mxu0 0
      %731 = vmatpush2.bf16.msra.mxu0 0
      %732 = vmatprep.subr.bf16.mxu0 0
      %733 = vmatpush2.bf16.msra.mxu0 0
      %734 = vmatprep.subr.bf16.mxu0 0
      %735 = vmatpush2.bf16.msra.mxu0 0
      %736 = vmatprep.mubr.bf16.mxu0 0
      %737 = vmatmul.mubr.bf16.gmra.mxu0 %v638
      %v738 = vpop.f32.mrf.mxu0
      %v739 = vadd.f32 0.0, %v738
      %v740 = vpop.f32.mrf.mxu0
      %v741 = vpop.f32.mrf.mxu0
      %v742 = vpop.f32.mrf.mxu0
      %743 = vdwg.mxu0
      %v744 = vld [vmem:[%s342] sm:$0xff]
      %v745 = vld [vmem:[%s342 + $0x8] sm:$0xff]
      %v746 = vld [vmem:[%s342 + $0x10] sm:$0xff]
      %v747 = vld [vmem:[%s342 + $0x18] sm:$0xff]
      %v748 = vld [vmem:[%s342 + $0x20] sm:$0xff]
      %v749 = vld [vmem:[%s342 + $0x28] sm:$0xff]
      %v750 = vld [vmem:[%s342 + $0x30] sm:$0xff]
      %v751 = vld [vmem:[%s342 + $0x38] sm:$0xff]
      %753 = vset.pattern.permute.xlu0 0
      %754 = vperm.xlu0 %753, %v744
      %v755 = vpop.permute.xlu0 %754
      %758 = vset.pattern.permute.xlu0 0
      %759 = vperm.xlu0 %758, %v745
      %v760 = vpop.permute.xlu0 %759
      %763 = vset.pattern.permute.xlu0 0
      %764 = vperm.xlu0 %763, %v746
      %v765 = vpop.permute.xlu0 %764
      %768 = vset.pattern.permute.xlu0 0
      %769 = vperm.xlu0 %768, %v747
      %v770 = vpop.permute.xlu0 %769
      %773 = vset.pattern.permute.xlu0 0
      %774 = vperm.xlu0 %773, %v748
      %v775 = vpop.permute.xlu0 %774
      %778 = vset.pattern.permute.xlu0 0
      %779 = vperm.xlu0 %778, %v749
      %v780 = vpop.permute.xlu0 %779
      %783 = vset.pattern.permute.xlu0 0
      %784 = vperm.xlu0 %783, %v750
      %v785 = vpop.permute.xlu0 %784
      %788 = vset.pattern.permute.xlu0 0
      %789 = vperm.xlu0 %788, %v751
      %v790 = vpop.permute.xlu0 %789
      %v792 = vlaneseq
      %v793 = vshrl.u32 %v792, 7
      %v794 = vsub.s32 3, %v793
      %v795 = vrot.slane %v363, %v794
      %v796 = vmul.f32 %v755, %v795
      %v797 = vmul.f32 %v760, %v795
      %v798 = vmul.f32 %v765, %v795
      %v799 = vmul.f32 %v770, %v795
      %v800 = vmul.f32 %v775, %v795
      %v801 = vmul.f32 %v780, %v795
      %v802 = vmul.f32 %v785, %v795
      %v803 = vmul.f32 %v790, %v795
      %804 = vset.pattern.permute.xlu0 1
      %805 = vperm.xlu0 %804, %v744
      %v806 = vpop.permute.xlu0 %805
      %808 = vset.pattern.permute.xlu0 1
      %809 = vperm.xlu0 %808, %v745
      %v810 = vpop.permute.xlu0 %809
      %812 = vset.pattern.permute.xlu0 1
      %813 = vperm.xlu0 %812, %v746
      %v814 = vpop.permute.xlu0 %813
      %816 = vset.pattern.permute.xlu0 1
      %817 = vperm.xlu0 %816, %v747
      %v818 = vpop.permute.xlu0 %817
      %820 = vset.pattern.permute.xlu0 1
      %821 = vperm.xlu0 %820, %v748
      %v822 = vpop.permute.xlu0 %821
      %824 = vset.pattern.permute.xlu0 1
      %825 = vperm.xlu0 %824, %v749
      %v826 = vpop.permute.xlu0 %825
      %828 = vset.pattern.permute.xlu0 1
      %829 = vperm.xlu0 %828, %v750
      %v830 = vpop.permute.xlu0 %829
      %832 = vset.pattern.permute.xlu0 1
      %833 = vperm.xlu0 %832, %v751
      %v834 = vpop.permute.xlu0 %833
      %v836 = vlaneseq
      %v837 = vshrl.u32 %v836, 7
      %v838 = vsub.s32 4, %v837
      %v839 = vrot.slane %v363, %v838
      %v840 = vmul.f32 %v806, %v839
      %v841 = vmul.f32 %v810, %v839
      %v842 = vmul.f32 %v814, %v839
      %v843 = vmul.f32 %v818, %v839
      %v844 = vmul.f32 %v822, %v839
      %v845 = vmul.f32 %v826, %v839
      %v846 = vmul.f32 %v830, %v839
      %v847 = vmul.f32 %v834, %v839
      %v848 = vadd.f32 %v796, %v840
      %v849 = vadd.f32 %v797, %v841
      %v850 = vadd.f32 %v798, %v842
      %v851 = vadd.f32 %v799, %v843
      %v852 = vadd.f32 %v800, %v844
      %v853 = vadd.f32 %v801, %v845
      %v854 = vadd.f32 %v802, %v846
      %v855 = vadd.f32 %v803, %v847
      %v856 = vlaneseq
      %v857 = vshrl.u32 %v856, 7
      %v858 = vsub.s32 5, %v857
      %v859 = vrot.slane %v363, %v858
      %v860 = vadd.f32 %v848, %v859
      %v861 = vadd.f32 %v849, %v859
      %v862 = vadd.f32 %v850, %v859
      %v863 = vadd.f32 %v851, %v859
      %v864 = vadd.f32 %v852, %v859
      %v865 = vadd.f32 %v853, %v859
      %v866 = vadd.f32 %v854, %v859
      %v867 = vadd.f32 %v855, %v859
      %v868 = vand.u32 2147483647, %v860
      %vm869 = vcmp.le.f32.partialorder %v868, 0.7853982
      %vm870 = vcmp.lt.s32.totalorder %v860, 0
      %v871 = vand.u32 %v860, 2139095040
      %v872 = vshrl.u32 %v871, 23
      %v873 = vsub.s32 %v872, 127
      %v874 = vand.u32 2147483647, %v860
      %v875 = vand.u32 %v874, 8388607
      %v876 = vor.u32 %v875, 8388608
      %v877 = vsub.s32 0, %v876
      %v878 = vadd.s32 %v873, 1
      %vm879 = vcmp.gt.s32.totalorder %v878, 0
      %v880 = vsel %vm879, %v878, 0
      %v881 = vshrl.u32 %v880, 5
      %v882 = vand.u32 %v880, 31
      %v883 = vsub.s32 32, %v882
      %v884 = vshrl.u32 683565275, %v883
      %v885 = vshll.u32 683565275, %v882
      %v886 = vshrl.u32 2475754826, %v883
      %v887 = vor.u32 %v885, %v886
      %v888 = vshll.u32 2475754826, %v882
      %v889 = vshrl.u32 2131351028, %v883
      %v890 = vor.u32 %v888, %v889
      %v891 = vshll.u32 2131351028, %v882
      %v892 = vshrl.u32 2102212464, %v883
      %v893 = vor.u32 %v891, %v892
      %v894 = vshll.u32 2102212464, %v882
      %v895 = vshrl.u32 920167782, %v883
      %v896 = vor.u32 %v894, %v895
      %v897 = vshll.u32 920167782, %v882
      %v898 = vshrl.u32 1326507024, %v883
      %v899 = vor.u32 %v897, %v898
      %vm900 = vcmp.lt.s32.totalorder %v881, 1
      %vm901 = vcmp.lt.s32.totalorder %v881, 2
      %vm902 = vcmp.lt.s32.totalorder %v881, 3
      %vm903 = vcmp.lt.s32.totalorder %v881, 4
      %v904 = vsel %vm900, %v884, %v887
      %v905 = vsel %vm903, %v893, 2102212464
      %v906 = vsel %vm902, %v890, %v905
      %v907 = vsel %vm901, %v904, %v906
      %v908 = vsel %vm900, %v887, %v890
      %v909 = vsel %vm903, %v896, 920167782
      %v910 = vsel %vm902, %v893, %v909
      %v911 = vsel %vm901, %v908, %v910
      %v912 = vsel %vm900, %v890, %v893
      %v913 = vsel %vm903, %v899, 1326507024
      %v914 = vsel %vm902, %v896, %v913
      %v915 = vsel %vm901, %v912, %v914
      %v916 = vshll.u32 %v876, 8
      %v917 = vmul.u32.u64.compose %v916, %v915
      %v918 = vextract.low.u32 %v917
      %v919 = vextract.high.u32 %v917
      %v920 = vmul.u32.u64.compose %v916, %v911
      %v921 = vextract.low.u32 %v920
      %v922 = vextract.high.u32 %v920
      %v923 = vmul.u32 %v916, %v907
      %v924 = vadd.s32 %v919, %v921
      %vm925 = vc.u32 %v919, %v921
      %v926 = vadd.s32 %v922, 1
      %v927 = vsel %vm925, %v926, %v922
      %v928 = vadd.s32 %v923, %v927
      %v929 = vadd.s32 %v928, 536870912
      %v930 = vshrl.u32 %v929, 30
      %v931 = vshll.u32 %v930, 30
      %v932 = vsub.s32 %v928, %v931
      %vm933 = vcmp.lt.s32.totalorder %v932, 0
      %v934 = vsub.s32 0, %v932
      %v935 = vsel %vm933, %v934, %v932
      %v936 = vclz %v935
      %v937 = vsub.s32 %v936, 2
      %vm938 = vcmp.gt.s32.totalorder 0, %v937
      %v939 = vsel %vm938, 0, %v937
      %v940 = vsub.s32 32, %v939
      %v941 = vshll.u32 %v932, %v939
      %v942 = vshrl.u32 %v924, %v940
      %v943 = vor.u32 %v941, %v942
      %v944 = vsub.s32 4294967266, %v939
      %v945 = vadd.s32 %v944, 127
      %v946 = vshll.u32 %v945, 23
      %v947 = vor.u32 4788187, %v946
      %v948 = vand.u32 2147483647, %v947
      %v950 = vcvt.s32.f32 %v943
      %v951 = vmul.f32 %v950, %v948
      %v952 = vxor.u32 %v951, 2147483648
      %v953 = vsel %vm870, %v952, %v951
      %v954 = vsub.s32 4, %v930
      %v955 = vsel %vm870, %v954, %v930
      %v956 = vsel %vm869, %v860, %v953
      %v957 = vsel %vm869, 0, %v955
      %v958 = vcosq.f32.pop %v956
      %v959 = vsinq.f32.pop %v956
      %vm960 = vweird.f32 %v860
      %v961 = vadd.s32 %v957, 3
      %v962 = vand.u32 %v961, 3
      %vm963 = vcmp.lt.s32.totalorder %v962, 2
      %vm964 = vcmp.eq.s32.totalorder %v962, 0
      %v965 = vxor.u32 %v959, 2147483648
      %v966 = vsel %vm964, %v958, %v965
      %vm967 = vcmp.eq.s32.totalorder %v962, 2
      %v968 = vxor.u32 %v958, 2147483648
      %v969 = vsel %vm967, %v968, %v959
      %v970 = vsel %vm963, %v966, %v969
      %v971 = vsel %vm960, nan, %v970
      %v972 = vand.u32 2147483647, %v861
      %vm973 = vcmp.le.f32.partialorder %v972, 0.7853982
      %vm974 = vcmp.lt.s32.totalorder %v861, 0
      %v975 = vand.u32 %v861, 2139095040
      %v976 = vshrl.u32 %v975, 23
      %v977 = vsub.s32 %v976, 127
      %v978 = vand.u32 2147483647, %v861
      %v979 = vand.u32 %v978, 8388607
      %v980 = vor.u32 %v979, 8388608
      %v981 = vsub.s32 0, %v980
      %v982 = vadd.s32 %v977, 1
      %vm983 = vcmp.gt.s32.totalorder %v982, 0
      %v984 = vsel %vm983, %v982, 0
      %v985 = vshrl.u32 %v984, 5
      %v986 = vand.u32 %v984, 31
      %v987 = vsub.s32 32, %v986
      %v988 = vshrl.u32 683565275, %v987
      %v989 = vshll.u32 683565275, %v986
      %v990 = vshrl.u32 2475754826, %v987
      %v991 = vor.u32 %v989, %v990
      %v992 = vshll.u32 2475754826, %v986
      %v993 = vshrl.u32 2131351028, %v987
      %v994 = vor.u32 %v992, %v993
      %v995 = vshll.u32 2131351028, %v986
      %v996 = vshrl.u32 2102212464, %v987
      %v997 = vor.u32 %v995, %v996
      %v998 = vshll.u32 2102212464, %v986
      %v999 = vshrl.u32 920167782, %v987
      %v1000 = vor.u32 %v998, %v999
      %v1001 = vshll.u32 920167782, %v986
      %v1002 = vshrl.u32 1326507024, %v987
      %v1003 = vor.u32 %v1001, %v1002
      %vm1004 = vcmp.lt.s32.totalorder %v985, 1
      %vm1005 = vcmp.lt.s32.totalorder %v985, 2
      %vm1006 = vcmp.lt.s32.totalorder %v985, 3
      %vm1007 = vcmp.lt.s32.totalorder %v985, 4
      %v1008 = vsel %vm1004, %v988, %v991
      %v1009 = vsel %vm1007, %v997, 2102212464
      %v1010 = vsel %vm1006, %v994, %v1009
      %v1011 = vsel %vm1005, %v1008, %v1010
      %v1012 = vsel %vm1004, %v991, %v994
      %v1013 = vsel %vm1007, %v1000, 920167782
      %v1014 = vsel %vm1006, %v997, %v1013
      %v1015 = vsel %vm1005, %v1012, %v1014
      %v1016 = vsel %vm1004, %v994, %v997
      %v1017 = vsel %vm1007, %v1003, 1326507024
      %v1018 = vsel %vm1006, %v1000, %v1017
      %v1019 = vsel %vm1005, %v1016, %v1018
      %v1020 = vshll.u32 %v980, 8
      %v1021 = vmul.u32.u64.compose %v1020, %v1019
      %v1022 = vextract.low.u32 %v1021
      %v1023 = vextract.high.u32 %v1021
      %v1024 = vmul.u32.u64.compose %v1020, %v1015
      %v1025 = vextract.low.u32 %v1024
      %v1026 = vextract.high.u32 %v1024
      %v1027 = vmul.u32 %v1020, %v1011
      %v1028 = vadd.s32 %v1023, %v1025
      %vm1029 = vc.u32 %v1023, %v1025
      %v1030 = vadd.s32 %v1026, 1
      %v1031 = vsel %vm1029, %v1030, %v1026
      %v1032 = vadd.s32 %v1027, %v1031
      %v1033 = vadd.s32 %v1032, 536870912
      %v1034 = vshrl.u32 %v1033, 30
      %v1035 = vshll.u32 %v1034, 30
      %v1036 = vsub.s32 %v1032, %v1035
      %vm1037 = vcmp.lt.s32.totalorder %v1036, 0
      %v1038 = vsub.s32 0, %v1036
      %v1039 = vsel %vm1037, %v1038, %v1036
      %v1040 = vclz %v1039
      %v1041 = vsub.s32 %v1040, 2
      %vm1042 = vcmp.gt.s32.totalorder 0, %v1041
      %v1043 = vsel %vm1042, 0, %v1041
      %v1044 = vsub.s32 32, %v1043
      %v1045 = vshll.u32 %v1036, %v1043
      %v1046 = vshrl.u32 %v1028, %v1044
      %v1047 = vor.u32 %v1045, %v1046
      %v1048 = vsub.s32 4294967266, %v1043
      %v1049 = vadd.s32 %v1048, 127
      %v1050 = vshll.u32 %v1049, 23
      %v1051 = vor.u32 4788187, %v1050
      %v1052 = vand.u32 2147483647, %v1051
      %v1054 = vcvt.s32.f32 %v1047
      %v1055 = vmul.f32 %v1054, %v1052
      %v1056 = vxor.u32 %v1055, 2147483648
      %v1057 = vsel %vm974, %v1056, %v1055
      %v1058 = vsub.s32 4, %v1034
      %v1059 = vsel %vm974, %v1058, %v1034
      %v1060 = vsel %vm973, %v861, %v1057
      %v1061 = vsel %vm973, 0, %v1059
      %v1062 = vcosq.f32.pop %v1060
      %v1063 = vsinq.f32.pop %v1060
      %vm1064 = vweird.f32 %v861
      %v1065 = vadd.s32 %v1061, 3
      %v1066 = vand.u32 %v1065, 3
      %vm1067 = vcmp.lt.s32.totalorder %v1066, 2
      %vm1068 = vcmp.eq.s32.totalorder %v1066, 0
      %v1069 = vxor.u32 %v1063, 2147483648
      %v1070 = vsel %vm1068, %v1062, %v1069
      %vm1071 = vcmp.eq.s32.totalorder %v1066, 2
      %v1072 = vxor.u32 %v1062, 2147483648
      %v1073 = vsel %vm1071, %v1072, %v1063
      %v1074 = vsel %vm1067, %v1070, %v1073
      %v1075 = vsel %vm1064, nan, %v1074
      %v1076 = vand.u32 2147483647, %v862
      %vm1077 = vcmp.le.f32.partialorder %v1076, 0.7853982
      %vm1078 = vcmp.lt.s32.totalorder %v862, 0
      %v1079 = vand.u32 %v862, 2139095040
      %v1080 = vshrl.u32 %v1079, 23
      %v1081 = vsub.s32 %v1080, 127
      %v1082 = vand.u32 2147483647, %v862
      %v1083 = vand.u32 %v1082, 8388607
      %v1084 = vor.u32 %v1083, 8388608
      %v1085 = vsub.s32 0, %v1084
      %v1086 = vadd.s32 %v1081, 1
      %vm1087 = vcmp.gt.s32.totalorder %v1086, 0
      %v1088 = vsel %vm1087, %v1086, 0
      %v1089 = vshrl.u32 %v1088, 5
      %v1090 = vand.u32 %v1088, 31
      %v1091 = vsub.s32 32, %v1090
      %v1092 = vshrl.u32 683565275, %v1091
      %v1093 = vshll.u32 683565275, %v1090
      %v1094 = vshrl.u32 2475754826, %v1091
      %v1095 = vor.u32 %v1093, %v1094
      %v1096 = vshll.u32 2475754826, %v1090
      %v1097 = vshrl.u32 2131351028, %v1091
      %v1098 = vor.u32 %v1096, %v1097
      %v1099 = vshll.u32 2131351028, %v1090
      %v1100 = vshrl.u32 2102212464, %v1091
      %v1101 = vor.u32 %v1099, %v1100
      %v1102 = vshll.u32 2102212464, %v1090
      %v1103 = vshrl.u32 920167782, %v1091
      %v1104 = vor.u32 %v1102, %v1103
      %v1105 = vshll.u32 920167782, %v1090
      %v1106 = vshrl.u32 1326507024, %v1091
      %v1107 = vor.u32 %v1105, %v1106
      %vm1108 = vcmp.lt.s32.totalorder %v1089, 1
      %vm1109 = vcmp.lt.s32.totalorder %v1089, 2
      %vm1110 = vcmp.lt.s32.totalorder %v1089, 3
      %vm1111 = vcmp.lt.s32.totalorder %v1089, 4
      %v1112 = vsel %vm1108, %v1092, %v1095
      %v1113 = vsel %vm1111, %v1101, 2102212464
      %v1114 = vsel %vm1110, %v1098, %v1113
      %v1115 = vsel %vm1109, %v1112, %v1114
      %v1116 = vsel %vm1108, %v1095, %v1098
      %v1117 = vsel %vm1111, %v1104, 920167782
      %v1118 = vsel %vm1110, %v1101, %v1117
      %v1119 = vsel %vm1109, %v1116, %v1118
      %v1120 = vsel %vm1108, %v1098, %v1101
      %v1121 = vsel %vm1111, %v1107, 1326507024
      %v1122 = vsel %vm1110, %v1104, %v1121
      %v1123 = vsel %vm1109, %v1120, %v1122
      %v1124 = vshll.u32 %v1084, 8
      %v1125 = vmul.u32.u64.compose %v1124, %v1123
      %v1126 = vextract.low.u32 %v1125
      %v1127 = vextract.high.u32 %v1125
      %v1128 = vmul.u32.u64.compose %v1124, %v1119
      %v1129 = vextract.low.u32 %v1128
      %v1130 = vextract.high.u32 %v1128
      %v1131 = vmul.u32 %v1124, %v1115
      %v1132 = vadd.s32 %v1127, %v1129
      %vm1133 = vc.u32 %v1127, %v1129
      %v1134 = vadd.s32 %v1130, 1
      %v1135 = vsel %vm1133, %v1134, %v1130
      %v1136 = vadd.s32 %v1131, %v1135
      %v1137 = vadd.s32 %v1136, 536870912
      %v1138 = vshrl.u32 %v1137, 30
      %v1139 = vshll.u32 %v1138, 30
      %v1140 = vsub.s32 %v1136, %v1139
      %vm1141 = vcmp.lt.s32.totalorder %v1140, 0
      %v1142 = vsub.s32 0, %v1140
      %v1143 = vsel %vm1141, %v1142, %v1140
      %v1144 = vclz %v1143
      %v1145 = vsub.s32 %v1144, 2
      %vm1146 = vcmp.gt.s32.totalorder 0, %v1145
      %v1147 = vsel %vm1146, 0, %v1145
      %v1148 = vsub.s32 32, %v1147
      %v1149 = vshll.u32 %v1140, %v1147
      %v1150 = vshrl.u32 %v1132, %v1148
      %v1151 = vor.u32 %v1149, %v1150
      %v1152 = vsub.s32 4294967266, %v1147
      %v1153 = vadd.s32 %v1152, 127
      %v1154 = vshll.u32 %v1153, 23
      %v1155 = vor.u32 4788187, %v1154
      %v1156 = vand.u32 2147483647, %v1155
      %v1158 = vcvt.s32.f32 %v1151
      %v1159 = vmul.f32 %v1158, %v1156
      %v1160 = vxor.u32 %v1159, 2147483648
      %v1161 = vsel %vm1078, %v1160, %v1159
      %v1162 = vsub.s32 4, %v1138
      %v1163 = vsel %vm1078, %v1162, %v1138
      %v1164 = vsel %vm1077, %v862, %v1161
      %v1165 = vsel %vm1077, 0, %v1163
      %v1166 = vcosq.f32.pop %v1164
      %v1167 = vsinq.f32.pop %v1164
      %vm1168 = vweird.f32 %v862
      %v1169 = vadd.s32 %v1165, 3
      %v1170 = vand.u32 %v1169, 3
      %vm1171 = vcmp.lt.s32.totalorder %v1170, 2
      %vm1172 = vcmp.eq.s32.totalorder %v1170, 0
      %v1173 = vxor.u32 %v1167, 2147483648
      %v1174 = vsel %vm1172, %v1166, %v1173
      %vm1175 = vcmp.eq.s32.totalorder %v1170, 2
      %v1176 = vxor.u32 %v1166, 2147483648
      %v1177 = vsel %vm1175, %v1176, %v1167
      %v1178 = vsel %vm1171, %v1174, %v1177
      %v1179 = vsel %vm1168, nan, %v1178
      %v1180 = vand.u32 2147483647, %v863
      %vm1181 = vcmp.le.f32.partialorder %v1180, 0.7853982
      %vm1182 = vcmp.lt.s32.totalorder %v863, 0
      %v1183 = vand.u32 %v863, 2139095040
      %v1184 = vshrl.u32 %v1183, 23
      %v1185 = vsub.s32 %v1184, 127
      %v1186 = vand.u32 2147483647, %v863
      %v1187 = vand.u32 %v1186, 8388607
      %v1188 = vor.u32 %v1187, 8388608
      %v1189 = vsub.s32 0, %v1188
      %v1190 = vadd.s32 %v1185, 1
      %vm1191 = vcmp.gt.s32.totalorder %v1190, 0
      %v1192 = vsel %vm1191, %v1190, 0
      %v1193 = vshrl.u32 %v1192, 5
      %v1194 = vand.u32 %v1192, 31
      %v1195 = vsub.s32 32, %v1194
      %v1196 = vshrl.u32 683565275, %v1195
      %v1197 = vshll.u32 683565275, %v1194
      %v1198 = vshrl.u32 2475754826, %v1195
      %v1199 = vor.u32 %v1197, %v1198
      %v1200 = vshll.u32 2475754826, %v1194
      %v1201 = vshrl.u32 2131351028, %v1195
      %v1202 = vor.u32 %v1200, %v1201
      %v1203 = vshll.u32 2131351028, %v1194
      %v1204 = vshrl.u32 2102212464, %v1195
      %v1205 = vor.u32 %v1203, %v1204
      %v1206 = vshll.u32 2102212464, %v1194
      %v1207 = vshrl.u32 920167782, %v1195
      %v1208 = vor.u32 %v1206, %v1207
      %v1209 = vshll.u32 920167782, %v1194
      %v1210 = vshrl.u32 1326507024, %v1195
      %v1211 = vor.u32 %v1209, %v1210
      %vm1212 = vcmp.lt.s32.totalorder %v1193, 1
      %vm1213 = vcmp.lt.s32.totalorder %v1193, 2
      %vm1214 = vcmp.lt.s32.totalorder %v1193, 3
      %vm1215 = vcmp.lt.s32.totalorder %v1193, 4
      %v1216 = vsel %vm1212, %v1196, %v1199
      %v1217 = vsel %vm1215, %v1205, 2102212464
      %v1218 = vsel %vm1214, %v1202, %v1217
      %v1219 = vsel %vm1213, %v1216, %v1218
      %v1220 = vsel %vm1212, %v1199, %v1202
      %v1221 = vsel %vm1215, %v1208, 920167782
      %v1222 = vsel %vm1214, %v1205, %v1221
      %v1223 = vsel %vm1213, %v1220, %v1222
      %v1224 = vsel %vm1212, %v1202, %v1205
      %v1225 = vsel %vm1215, %v1211, 1326507024
      %v1226 = vsel %vm1214, %v1208, %v1225
      %v1227 = vsel %vm1213, %v1224, %v1226
      %v1228 = vshll.u32 %v1188, 8
      %v1229 = vmul.u32.u64.compose %v1228, %v1227
      %v1230 = vextract.low.u32 %v1229
      %v1231 = vextract.high.u32 %v1229
      %v1232 = vmul.u32.u64.compose %v1228, %v1223
      %v1233 = vextract.low.u32 %v1232
      %v1234 = vextract.high.u32 %v1232
      %v1235 = vmul.u32 %v1228, %v1219
      %v1236 = vadd.s32 %v1231, %v1233
      %vm1237 = vc.u32 %v1231, %v1233
      %v1238 = vadd.s32 %v1234, 1
      %v1239 = vsel %vm1237, %v1238, %v1234
      %v1240 = vadd.s32 %v1235, %v1239
      %v1241 = vadd.s32 %v1240, 536870912
      %v1242 = vshrl.u32 %v1241, 30
      %v1243 = vshll.u32 %v1242, 30
      %v1244 = vsub.s32 %v1240, %v1243
      %vm1245 = vcmp.lt.s32.totalorder %v1244, 0
      %v1246 = vsub.s32 0, %v1244
      %v1247 = vsel %vm1245, %v1246, %v1244
      %v1248 = vclz %v1247
      %v1249 = vsub.s32 %v1248, 2
      %vm1250 = vcmp.gt.s32.totalorder 0, %v1249
      %v1251 = vsel %vm1250, 0, %v1249
      %v1252 = vsub.s32 32, %v1251
      %v1253 = vshll.u32 %v1244, %v1251
      %v1254 = vshrl.u32 %v1236, %v1252
      %v1255 = vor.u32 %v1253, %v1254
      %v1256 = vsub.s32 4294967266, %v1251
      %v1257 = vadd.s32 %v1256, 127
      %v1258 = vshll.u32 %v1257, 23
      %v1259 = vor.u32 4788187, %v1258
      %v1260 = vand.u32 2147483647, %v1259
      %v1262 = vcvt.s32.f32 %v1255
      %v1263 = vmul.f32 %v1262, %v1260
      %v1264 = vxor.u32 %v1263, 2147483648
      %v1265 = vsel %vm1182, %v1264, %v1263
      %v1266 = vsub.s32 4, %v1242
      %v1267 = vsel %vm1182, %v1266, %v1242
      %v1268 = vsel %vm1181, %v863, %v1265
      %v1269 = vsel %vm1181, 0, %v1267
      %v1270 = vcosq.f32.pop %v1268
      %v1271 = vsinq.f32.pop %v1268
      %vm1272 = vweird.f32 %v863
      %v1273 = vadd.s32 %v1269, 3
      %v1274 = vand.u32 %v1273, 3
      %vm1275 = vcmp.lt.s32.totalorder %v1274, 2
      %vm1276 = vcmp.eq.s32.totalorder %v1274, 0
      %v1277 = vxor.u32 %v1271, 2147483648
      %v1278 = vsel %vm1276, %v1270, %v1277
      %vm1279 = vcmp.eq.s32.totalorder %v1274, 2
      %v1280 = vxor.u32 %v1270, 2147483648
      %v1281 = vsel %vm1279, %v1280, %v1271
      %v1282 = vsel %vm1275, %v1278, %v1281
      %v1283 = vsel %vm1272, nan, %v1282
      %v1284 = vand.u32 2147483647, %v864
      %vm1285 = vcmp.le.f32.partialorder %v1284, 0.7853982
      %vm1286 = vcmp.lt.s32.totalorder %v864, 0
      %v1287 = vand.u32 %v864, 2139095040
      %v1288 = vshrl.u32 %v1287, 23
      %v1289 = vsub.s32 %v1288, 127
      %v1290 = vand.u32 2147483647, %v864
      %v1291 = vand.u32 %v1290, 8388607
      %v1292 = vor.u32 %v1291, 8388608
      %v1293 = vsub.s32 0, %v1292
      %v1294 = vadd.s32 %v1289, 1
      %vm1295 = vcmp.gt.s32.totalorder %v1294, 0
      %v1296 = vsel %vm1295, %v1294, 0
      %v1297 = vshrl.u32 %v1296, 5
      %v1298 = vand.u32 %v1296, 31
      %v1299 = vsub.s32 32, %v1298
      %v1300 = vshrl.u32 683565275, %v1299
      %v1301 = vshll.u32 683565275, %v1298
      %v1302 = vshrl.u32 2475754826, %v1299
      %v1303 = vor.u32 %v1301, %v1302
      %v1304 = vshll.u32 2475754826, %v1298
      %v1305 = vshrl.u32 2131351028, %v1299
      %v1306 = vor.u32 %v1304, %v1305
      %v1307 = vshll.u32 2131351028, %v1298
      %v1308 = vshrl.u32 2102212464, %v1299
      %v1309 = vor.u32 %v1307, %v1308
      %v1310 = vshll.u32 2102212464, %v1298
      %v1311 = vshrl.u32 920167782, %v1299
      %v1312 = vor.u32 %v1310, %v1311
      %v1313 = vshll.u32 920167782, %v1298
      %v1314 = vshrl.u32 1326507024, %v1299
      %v1315 = vor.u32 %v1313, %v1314
      %vm1316 = vcmp.lt.s32.totalorder %v1297, 1
      %vm1317 = vcmp.lt.s32.totalorder %v1297, 2
      %vm1318 = vcmp.lt.s32.totalorder %v1297, 3
      %vm1319 = vcmp.lt.s32.totalorder %v1297, 4
      %v1320 = vsel %vm1316, %v1300, %v1303
      %v1321 = vsel %vm1319, %v1309, 2102212464
      %v1322 = vsel %vm1318, %v1306, %v1321
      %v1323 = vsel %vm1317, %v1320, %v1322
      %v1324 = vsel %vm1316, %v1303, %v1306
      %v1325 = vsel %vm1319, %v1312, 920167782
      %v1326 = vsel %vm1318, %v1309, %v1325
      %v1327 = vsel %vm1317, %v1324, %v1326
      %v1328 = vsel %vm1316, %v1306, %v1309
      %v1329 = vsel %vm1319, %v1315, 1326507024
      %v1330 = vsel %vm1318, %v1312, %v1329
      %v1331 = vsel %vm1317, %v1328, %v1330
      %v1332 = vshll.u32 %v1292, 8
      %v1333 = vmul.u32.u64.compose %v1332, %v1331
      %v1334 = vextract.low.u32 %v1333
      %v1335 = vextract.high.u32 %v1333
      %v1336 = vmul.u32.u64.compose %v1332, %v1327
      %v1337 = vextract.low.u32 %v1336
      %v1338 = vextract.high.u32 %v1336
      %v1339 = vmul.u32 %v1332, %v1323
      %v1340 = vadd.s32 %v1335, %v1337
      %vm1341 = vc.u32 %v1335, %v1337
      %v1342 = vadd.s32 %v1338, 1
      %v1343 = vsel %vm1341, %v1342, %v1338
      %v1344 = vadd.s32 %v1339, %v1343
      %v1345 = vadd.s32 %v1344, 536870912
      %v1346 = vshrl.u32 %v1345, 30
      %v1347 = vshll.u32 %v1346, 30
      %v1348 = vsub.s32 %v1344, %v1347
      %vm1349 = vcmp.lt.s32.totalorder %v1348, 0
      %v1350 = vsub.s32 0, %v1348
      %v1351 = vsel %vm1349, %v1350, %v1348
      %v1352 = vclz %v1351
      %v1353 = vsub.s32 %v1352, 2
      %vm1354 = vcmp.gt.s32.totalorder 0, %v1353
      %v1355 = vsel %vm1354, 0, %v1353
      %v1356 = vsub.s32 32, %v1355
      %v1357 = vshll.u32 %v1348, %v1355
      %v1358 = vshrl.u32 %v1340, %v1356
      %v1359 = vor.u32 %v1357, %v1358
      %v1360 = vsub.s32 4294967266, %v1355
      %v1361 = vadd.s32 %v1360, 127
      %v1362 = vshll.u32 %v1361, 23
      %v1363 = vor.u32 4788187, %v1362
      %v1364 = vand.u32 2147483647, %v1363
      %v1366 = vcvt.s32.f32 %v1359
      %v1367 = vmul.f32 %v1366, %v1364
      %v1368 = vxor.u32 %v1367, 2147483648
      %v1369 = vsel %vm1286, %v1368, %v1367
      %v1370 = vsub.s32 4, %v1346
      %v1371 = vsel %vm1286, %v1370, %v1346
      %v1372 = vsel %vm1285, %v864, %v1369
      %v1373 = vsel %vm1285, 0, %v1371
      %v1374 = vcosq.f32.pop %v1372
      %v1375 = vsinq.f32.pop %v1372
      %vm1376 = vweird.f32 %v864
      %v1377 = vadd.s32 %v1373, 3
      %v1378 = vand.u32 %v1377, 3
      %vm1379 = vcmp.lt.s32.totalorder %v1378, 2
      %vm1380 = vcmp.eq.s32.totalorder %v1378, 0
      %v1381 = vxor.u32 %v1375, 2147483648
      %v1382 = vsel %vm1380, %v1374, %v1381
      %vm1383 = vcmp.eq.s32.totalorder %v1378, 2
      %v1384 = vxor.u32 %v1374, 2147483648
      %v1385 = vsel %vm1383, %v1384, %v1375
      %v1386 = vsel %vm1379, %v1382, %v1385
      %v1387 = vsel %vm1376, nan, %v1386
      %v1388 = vand.u32 2147483647, %v865
      %vm1389 = vcmp.le.f32.partialorder %v1388, 0.7853982
      %vm1390 = vcmp.lt.s32.totalorder %v865, 0
      %v1391 = vand.u32 %v865, 2139095040
      %v1392 = vshrl.u32 %v1391, 23
      %v1393 = vsub.s32 %v1392, 127
      %v1394 = vand.u32 2147483647, %v865
      %v1395 = vand.u32 %v1394, 8388607
      %v1396 = vor.u32 %v1395, 8388608
      %v1397 = vsub.s32 0, %v1396
      %v1398 = vadd.s32 %v1393, 1
      %vm1399 = vcmp.gt.s32.totalorder %v1398, 0
      %v1400 = vsel %vm1399, %v1398, 0
      %v1401 = vshrl.u32 %v1400, 5
      %v1402 = vand.u32 %v1400, 31
      %v1403 = vsub.s32 32, %v1402
      %v1404 = vshrl.u32 683565275, %v1403
      %v1405 = vshll.u32 683565275, %v1402
      %v1406 = vshrl.u32 2475754826, %v1403
      %v1407 = vor.u32 %v1405, %v1406
      %v1408 = vshll.u32 2475754826, %v1402
      %v1409 = vshrl.u32 2131351028, %v1403
      %v1410 = vor.u32 %v1408, %v1409
      %v1411 = vshll.u32 2131351028, %v1402
      %v1412 = vshrl.u32 2102212464, %v1403
      %v1413 = vor.u32 %v1411, %v1412
      %v1414 = vshll.u32 2102212464, %v1402
      %v1415 = vshrl.u32 920167782, %v1403
      %v1416 = vor.u32 %v1414, %v1415
      %v1417 = vshll.u32 920167782, %v1402
      %v1418 = vshrl.u32 1326507024, %v1403
      %v1419 = vor.u32 %v1417, %v1418
      %vm1420 = vcmp.lt.s32.totalorder %v1401, 1
      %vm1421 = vcmp.lt.s32.totalorder %v1401, 2
      %vm1422 = vcmp.lt.s32.totalorder %v1401, 3
      %vm1423 = vcmp.lt.s32.totalorder %v1401, 4
      %v1424 = vsel %vm1420, %v1404, %v1407
      %v1425 = vsel %vm1423, %v1413, 2102212464
      %v1426 = vsel %vm1422, %v1410, %v1425
      %v1427 = vsel %vm1421, %v1424, %v1426
      %v1428 = vsel %vm1420, %v1407, %v1410
      %v1429 = vsel %vm1423, %v1416, 920167782
      %v1430 = vsel %vm1422, %v1413, %v1429
      %v1431 = vsel %vm1421, %v1428, %v1430
      %v1432 = vsel %vm1420, %v1410, %v1413
      %v1433 = vsel %vm1423, %v1419, 1326507024
      %v1434 = vsel %vm1422, %v1416, %v1433
      %v1435 = vsel %vm1421, %v1432, %v1434
      %v1436 = vshll.u32 %v1396, 8
      %v1437 = vmul.u32.u64.compose %v1436, %v1435
      %v1438 = vextract.low.u32 %v1437
      %v1439 = vextract.high.u32 %v1437
      %v1440 = vmul.u32.u64.compose %v1436, %v1431
      %v1441 = vextract.low.u32 %v1440
      %v1442 = vextract.high.u32 %v1440
      %v1443 = vmul.u32 %v1436, %v1427
      %v1444 = vadd.s32 %v1439, %v1441
      %vm1445 = vc.u32 %v1439, %v1441
      %v1446 = vadd.s32 %v1442, 1
      %v1447 = vsel %vm1445, %v1446, %v1442
      %v1448 = vadd.s32 %v1443, %v1447
      %v1449 = vadd.s32 %v1448, 536870912
      %v1450 = vshrl.u32 %v1449, 30
      %v1451 = vshll.u32 %v1450, 30
      %v1452 = vsub.s32 %v1448, %v1451
      %vm1453 = vcmp.lt.s32.totalorder %v1452, 0
      %v1454 = vsub.s32 0, %v1452
      %v1455 = vsel %vm1453, %v1454, %v1452
      %v1456 = vclz %v1455
      %v1457 = vsub.s32 %v1456, 2
      %vm1458 = vcmp.gt.s32.totalorder 0, %v1457
      %v1459 = vsel %vm1458, 0, %v1457
      %v1460 = vsub.s32 32, %v1459
      %v1461 = vshll.u32 %v1452, %v1459
      %v1462 = vshrl.u32 %v1444, %v1460
      %v1463 = vor.u32 %v1461, %v1462
      %v1464 = vsub.s32 4294967266, %v1459
      %v1465 = vadd.s32 %v1464, 127
      %v1466 = vshll.u32 %v1465, 23
      %v1467 = vor.u32 4788187, %v1466
      %v1468 = vand.u32 2147483647, %v1467
      %v1470 = vcvt.s32.f32 %v1463
      %v1471 = vmul.f32 %v1470, %v1468
      %v1472 = vxor.u32 %v1471, 2147483648
      %v1473 = vsel %vm1390, %v1472, %v1471
      %v1474 = vsub.s32 4, %v1450
      %v1475 = vsel %vm1390, %v1474, %v1450
      %v1476 = vsel %vm1389, %v865, %v1473
      %v1477 = vsel %vm1389, 0, %v1475
      %v1478 = vcosq.f32.pop %v1476
      %v1479 = vsinq.f32.pop %v1476
      %vm1480 = vweird.f32 %v865
      %v1481 = vadd.s32 %v1477, 3
      %v1482 = vand.u32 %v1481, 3
      %vm1483 = vcmp.lt.s32.totalorder %v1482, 2
      %vm1484 = vcmp.eq.s32.totalorder %v1482, 0
      %v1485 = vxor.u32 %v1479, 2147483648
      %v1486 = vsel %vm1484, %v1478, %v1485
      %vm1487 = vcmp.eq.s32.totalorder %v1482, 2
      %v1488 = vxor.u32 %v1478, 2147483648
      %v1489 = vsel %vm1487, %v1488, %v1479
      %v1490 = vsel %vm1483, %v1486, %v1489
      %v1491 = vsel %vm1480, nan, %v1490
      %v1492 = vand.u32 2147483647, %v866
      %vm1493 = vcmp.le.f32.partialorder %v1492, 0.7853982
      %vm1494 = vcmp.lt.s32.totalorder %v866, 0
      %v1495 = vand.u32 %v866, 2139095040
      %v1496 = vshrl.u32 %v1495, 23
      %v1497 = vsub.s32 %v1496, 127
      %v1498 = vand.u32 2147483647, %v866
      %v1499 = vand.u32 %v1498, 8388607
      %v1500 = vor.u32 %v1499, 8388608
      %v1501 = vsub.s32 0, %v1500
      %v1502 = vadd.s32 %v1497, 1
      %vm1503 = vcmp.gt.s32.totalorder %v1502, 0
      %v1504 = vsel %vm1503, %v1502, 0
      %v1505 = vshrl.u32 %v1504, 5
      %v1506 = vand.u32 %v1504, 31
      %v1507 = vsub.s32 32, %v1506
      %v1508 = vshrl.u32 683565275, %v1507
      %v1509 = vshll.u32 683565275, %v1506
      %v1510 = vshrl.u32 2475754826, %v1507
      %v1511 = vor.u32 %v1509, %v1510
      %v1512 = vshll.u32 2475754826, %v1506
      %v1513 = vshrl.u32 2131351028, %v1507
      %v1514 = vor.u32 %v1512, %v1513
      %v1515 = vshll.u32 2131351028, %v1506
      %v1516 = vshrl.u32 2102212464, %v1507
      %v1517 = vor.u32 %v1515, %v1516
      %v1518 = vshll.u32 2102212464, %v1506
      %v1519 = vshrl.u32 920167782, %v1507
      %v1520 = vor.u32 %v1518, %v1519
      %v1521 = vshll.u32 920167782, %v1506
      %v1522 = vshrl.u32 1326507024, %v1507
      %v1523 = vor.u32 %v1521, %v1522
      %vm1524 = vcmp.lt.s32.totalorder %v1505, 1
      %vm1525 = vcmp.lt.s32.totalorder %v1505, 2
      %vm1526 = vcmp.lt.s32.totalorder %v1505, 3
      %vm1527 = vcmp.lt.s32.totalorder %v1505, 4
      %v1528 = vsel %vm1524, %v1508, %v1511
      %v1529 = vsel %vm1527, %v1517, 2102212464
      %v1530 = vsel %vm1526, %v1514, %v1529
      %v1531 = vsel %vm1525, %v1528, %v1530
      %v1532 = vsel %vm1524, %v1511, %v1514
      %v1533 = vsel %vm1527, %v1520, 920167782
      %v1534 = vsel %vm1526, %v1517, %v1533
      %v1535 = vsel %vm1525, %v1532, %v1534
      %v1536 = vsel %vm1524, %v1514, %v1517
      %v1537 = vsel %vm1527, %v1523, 1326507024
      %v1538 = vsel %vm1526, %v1520, %v1537
      %v1539 = vsel %vm1525, %v1536, %v1538
      %v1540 = vshll.u32 %v1500, 8
      %v1541 = vmul.u32.u64.compose %v1540, %v1539
      %v1542 = vextract.low.u32 %v1541
      %v1543 = vextract.high.u32 %v1541
      %v1544 = vmul.u32.u64.compose %v1540, %v1535
      %v1545 = vextract.low.u32 %v1544
      %v1546 = vextract.high.u32 %v1544
      %v1547 = vmul.u32 %v1540, %v1531
      %v1548 = vadd.s32 %v1543, %v1545
      %vm1549 = vc.u32 %v1543, %v1545
      %v1550 = vadd.s32 %v1546, 1
      %v1551 = vsel %vm1549, %v1550, %v1546
      %v1552 = vadd.s32 %v1547, %v1551
      %v1553 = vadd.s32 %v1552, 536870912
      %v1554 = vshrl.u32 %v1553, 30
      %v1555 = vshll.u32 %v1554, 30
      %v1556 = vsub.s32 %v1552, %v1555
      %vm1557 = vcmp.lt.s32.totalorder %v1556, 0
      %v1558 = vsub.s32 0, %v1556
      %v1559 = vsel %vm1557, %v1558, %v1556
      %v1560 = vclz %v1559
      %v1561 = vsub.s32 %v1560, 2
      %vm1562 = vcmp.gt.s32.totalorder 0, %v1561
      %v1563 = vsel %vm1562, 0, %v1561
      %v1564 = vsub.s32 32, %v1563
      %v1565 = vshll.u32 %v1556, %v1563
      %v1566 = vshrl.u32 %v1548, %v1564
      %v1567 = vor.u32 %v1565, %v1566
      %v1568 = vsub.s32 4294967266, %v1563
      %v1569 = vadd.s32 %v1568, 127
      %v1570 = vshll.u32 %v1569, 23
      %v1571 = vor.u32 4788187, %v1570
      %v1572 = vand.u32 2147483647, %v1571
      %v1574 = vcvt.s32.f32 %v1567
      %v1575 = vmul.f32 %v1574, %v1572
      %v1576 = vxor.u32 %v1575, 2147483648
      %v1577 = vsel %vm1494, %v1576, %v1575
      %v1578 = vsub.s32 4, %v1554
      %v1579 = vsel %vm1494, %v1578, %v1554
      %v1580 = vsel %vm1493, %v866, %v1577
      %v1581 = vsel %vm1493, 0, %v1579
      %v1582 = vcosq.f32.pop %v1580
      %v1583 = vsinq.f32.pop %v1580
      %vm1584 = vweird.f32 %v866
      %v1585 = vadd.s32 %v1581, 3
      %v1586 = vand.u32 %v1585, 3
      %vm1587 = vcmp.lt.s32.totalorder %v1586, 2
      %vm1588 = vcmp.eq.s32.totalorder %v1586, 0
      %v1589 = vxor.u32 %v1583, 2147483648
      %v1590 = vsel %vm1588, %v1582, %v1589
      %vm1591 = vcmp.eq.s32.totalorder %v1586, 2
      %v1592 = vxor.u32 %v1582, 2147483648
      %v1593 = vsel %vm1591, %v1592, %v1583
      %v1594 = vsel %vm1587, %v1590, %v1593
      %v1595 = vsel %vm1584, nan, %v1594
      %v1596 = vand.u32 2147483647, %v867
      %vm1597 = vcmp.le.f32.partialorder %v1596, 0.7853982
      %vm1598 = vcmp.lt.s32.totalorder %v867, 0
      %v1599 = vand.u32 %v867, 2139095040
      %v1600 = vshrl.u32 %v1599, 23
      %v1601 = vsub.s32 %v1600, 127
      %v1602 = vand.u32 2147483647, %v867
      %v1603 = vand.u32 %v1602, 8388607
      %v1604 = vor.u32 %v1603, 8388608
      %v1605 = vsub.s32 0, %v1604
      %v1606 = vadd.s32 %v1601, 1
      %vm1607 = vcmp.gt.s32.totalorder %v1606, 0
      %v1608 = vsel %vm1607, %v1606, 0
      %v1609 = vshrl.u32 %v1608, 5
      %v1610 = vand.u32 %v1608, 31
      %v1611 = vsub.s32 32, %v1610
      %v1612 = vshrl.u32 683565275, %v1611
      %v1613 = vshll.u32 683565275, %v1610
      %v1614 = vshrl.u32 2475754826, %v1611
      %v1615 = vor.u32 %v1613, %v1614
      %v1616 = vshll.u32 2475754826, %v1610
      %v1617 = vshrl.u32 2131351028, %v1611
      %v1618 = vor.u32 %v1616, %v1617
      %v1619 = vshll.u32 2131351028, %v1610
      %v1620 = vshrl.u32 2102212464, %v1611
      %v1621 = vor.u32 %v1619, %v1620
      %v1622 = vshll.u32 2102212464, %v1610
      %v1623 = vshrl.u32 920167782, %v1611
      %v1624 = vor.u32 %v1622, %v1623
      %v1625 = vshll.u32 920167782, %v1610
      %v1626 = vshrl.u32 1326507024, %v1611
      %v1627 = vor.u32 %v1625, %v1626
      %vm1628 = vcmp.lt.s32.totalorder %v1609, 1
      %vm1629 = vcmp.lt.s32.totalorder %v1609, 2
      %vm1630 = vcmp.lt.s32.totalorder %v1609, 3
      %vm1631 = vcmp.lt.s32.totalorder %v1609, 4
      %v1632 = vsel %vm1628, %v1612, %v1615
      %v1633 = vsel %vm1631, %v1621, 2102212464
      %v1634 = vsel %vm1630, %v1618, %v1633
      %v1635 = vsel %vm1629, %v1632, %v1634
      %v1636 = vsel %vm1628, %v1615, %v1618
      %v1637 = vsel %vm1631, %v1624, 920167782
      %v1638 = vsel %vm1630, %v1621, %v1637
      %v1639 = vsel %vm1629, %v1636, %v1638
      %v1640 = vsel %vm1628, %v1618, %v1621
      %v1641 = vsel %vm1631, %v1627, 1326507024
      %v1642 = vsel %vm1630, %v1624, %v1641
      %v1643 = vsel %vm1629, %v1640, %v1642
      %v1644 = vshll.u32 %v1604, 8
      %v1645 = vmul.u32.u64.compose %v1644, %v1643
      %v1646 = vextract.low.u32 %v1645
      %v1647 = vextract.high.u32 %v1645
      %v1648 = vmul.u32.u64.compose %v1644, %v1639
      %v1649 = vextract.low.u32 %v1648
      %v1650 = vextract.high.u32 %v1648
      %v1651 = vmul.u32 %v1644, %v1635
      %v1652 = vadd.s32 %v1647, %v1649
      %vm1653 = vc.u32 %v1647, %v1649
      %v1654 = vadd.s32 %v1650, 1
      %v1655 = vsel %vm1653, %v1654, %v1650
      %v1656 = vadd.s32 %v1651, %v1655
      %v1657 = vadd.s32 %v1656, 536870912
      %v1658 = vshrl.u32 %v1657, 30
      %v1659 = vshll.u32 %v1658, 30
      %v1660 = vsub.s32 %v1656, %v1659
      %vm1661 = vcmp.lt.s32.totalorder %v1660, 0
      %v1662 = vsub.s32 0, %v1660
      %v1663 = vsel %vm1661, %v1662, %v1660
      %v1664 = vclz %v1663
      %v1665 = vsub.s32 %v1664, 2
      %vm1666 = vcmp.gt.s32.totalorder 0, %v1665
      %v1667 = vsel %vm1666, 0, %v1665
      %v1668 = vsub.s32 32, %v1667
      %v1669 = vshll.u32 %v1660, %v1667
      %v1670 = vshrl.u32 %v1652, %v1668
      %v1671 = vor.u32 %v1669, %v1670
      %v1672 = vsub.s32 4294967266, %v1667
      %v1673 = vadd.s32 %v1672, 127
      %v1674 = vshll.u32 %v1673, 23
      %v1675 = vor.u32 4788187, %v1674
      %v1676 = vand.u32 2147483647, %v1675
      %v1678 = vcvt.s32.f32 %v1671
      %v1679 = vmul.f32 %v1678, %v1676
      %v1680 = vxor.u32 %v1679, 2147483648
      %v1681 = vsel %vm1598, %v1680, %v1679
      %v1682 = vsub.s32 4, %v1658
      %v1683 = vsel %vm1598, %v1682, %v1658
      %v1684 = vsel %vm1597, %v867, %v1681
      %v1685 = vsel %vm1597, 0, %v1683
      %v1686 = vcosq.f32.pop %v1684
      %v1687 = vsinq.f32.pop %v1684
      %vm1688 = vweird.f32 %v867
      %v1689 = vadd.s32 %v1685, 3
      %v1690 = vand.u32 %v1689, 3
      %vm1691 = vcmp.lt.s32.totalorder %v1690, 2
      %vm1692 = vcmp.eq.s32.totalorder %v1690, 0
      %v1693 = vxor.u32 %v1687, 2147483648
      %v1694 = vsel %vm1692, %v1686, %v1693
      %vm1695 = vcmp.eq.s32.totalorder %v1690, 2
      %v1696 = vxor.u32 %v1686, 2147483648
      %v1697 = vsel %vm1695, %v1696, %v1687
      %v1698 = vsel %vm1691, %v1694, %v1697
      %v1699 = vsel %vm1688, nan, %v1698
      %s1700 = sld [smem:[#allocation2]]
      %v1701 = vpack.c.bf16 %v1075, %v971
      %v1702 = vpack.c.bf16 %v1283, %v1179
      %v1703 = vpack.c.bf16 %v1491, %v1387
      %v1704 = vpack.c.bf16 %v1699, %v1595
      %s1705 = scalar_lea.vmem %s6, 128
      %v1706 = vld [vmem:[%s1705] sm:$0xf]
      %v1707 = vld [vmem:[%s1705 + $0x4] sm:$0xf]
      %v1708 = vld [vmem:[%s1705 + $0x8] sm:$0xf]
      %v1709 = vld [vmem:[%s1705 + $0xc] sm:$0xf]
      %v1710 = vld [vmem:[%s1705 + $0x10] sm:$0xf]
      %v1711 = vld [vmem:[%s1705 + $0x14] sm:$0xf]
      %v1712 = vld [vmem:[%s1705 + $0x18] sm:$0xf]
      %v1713 = vld [vmem:[%s1705 + $0x1c] sm:$0xf]
      %v1714 = vld [vmem:[%s1705 + $0x20] sm:$0xf]
      %v1715 = vld [vmem:[%s1705 + $0x24] sm:$0xf]
      %v1716 = vld [vmem:[%s1705 + $0x28] sm:$0xf]
      %v1717 = vld [vmem:[%s1705 + $0x2c] sm:$0xf]
      %v1718 = vld [vmem:[%s1705 + $0x30] sm:$0xf]
      %v1719 = vld [vmem:[%s1705 + $0x34] sm:$0xf]
      %v1720 = vld [vmem:[%s1705 + $0x38] sm:$0xf]
      %v1721 = vld [vmem:[%s1705 + $0x3c] sm:$0xf]
      %v1722 = vlaneseq
      %v1723 = vshrl.u32 %v1722, 7
      %v1724 = vsub.s32 1, %v1723
      %v1725 = vrot.slane %v363, %v1724
      %v1726 = vmul.f32 %v755, %v1725
      %v1727 = vmul.f32 %v760, %v1725
      %v1728 = vmul.f32 %v765, %v1725
      %v1729 = vmul.f32 %v770, %v1725
      %v1730 = vmul.f32 %v775, %v1725
      %v1731 = vmul.f32 %v780, %v1725
      %v1732 = vmul.f32 %v785, %v1725
      %v1733 = vmul.f32 %v790, %v1725
      %v1750 = vunpack.c.l.b16 %v1706
      %v1751 = vunpack.c.l.b16 %v1707
      %v1752 = vunpack.c.l.b16 %v1708
      %v1753 = vunpack.c.l.b16 %v1709
      %v1754 = vunpack.c.l.b16 %v1710
      %v1755 = vunpack.c.l.b16 %v1711
      %v1756 = vunpack.c.l.b16 %v1712
      %v1757 = vunpack.c.l.b16 %v1713
      %v1758 = vunpack.c.l.b16 %v1714
      %v1759 = vunpack.c.l.b16 %v1715
      %v1760 = vunpack.c.l.b16 %v1716
      %v1761 = vunpack.c.l.b16 %v1717
      %v1762 = vunpack.c.l.b16 %v1718
      %v1763 = vunpack.c.l.b16 %v1719
      %v1764 = vunpack.c.l.b16 %v1720
      %v1765 = vunpack.c.l.b16 %v1721
      %v1766 = vpack.c.b16 %v1751, %v1750
      %v1767 = vpack.c.b16 %v1753, %v1752
      %v1768 = vpack.c.b16 %v1755, %v1754
      %v1769 = vpack.c.b16 %v1757, %v1756
      %v1770 = vpack.c.b16 %v1759, %v1758
      %v1771 = vpack.c.b16 %v1761, %v1760
      %v1772 = vpack.c.b16 %v1763, %v1762
      %v1773 = vpack.c.b16 %v1765, %v1764
      %1782 = vmatprep.subr.bf16.mxu0 0
      %1783 = vmatpush1.bf16.msra.mxu0 %v1773
      %1784 = vmatprep.subr.bf16.mxu0 0
      %1785 = vmatpush1.bf16.msra.mxu0 %v1772
      %1786 = vmatprep.subr.bf16.mxu0 0
      %1787 = vmatpush1.bf16.msra.mxu0 %v1771
      %1788 = vmatprep.subr.bf16.mxu0 0
      %1789 = vmatpush1.bf16.msra.mxu0 %v1770
      %1790 = vmatprep.subr.bf16.mxu0 0
      %1791 = vmatpush1.bf16.msra.mxu0 %v1769
      %1792 = vmatprep.subr.bf16.mxu0 0
      %1793 = vmatpush1.bf16.msra.mxu0 %v1768
      %1794 = vmatprep.subr.bf16.mxu0 0
      %1795 = vmatpush1.bf16.msra.mxu0 %v1767
      %1796 = vmatprep.subr.bf16.mxu0 0
      %1797 = vmatpush1.bf16.msra.mxu0 %v1766
      %1798 = vmatprep.subr.bf16.mxu0 0
      %1799 = vmatpush2.bf16.msra.mxu0 0
      %1800 = vmatprep.subr.bf16.mxu0 0
      %1801 = vmatpush2.bf16.msra.mxu0 0
      %1802 = vmatprep.subr.bf16.mxu0 0
      %1803 = vmatpush2.bf16.msra.mxu0 0
      %1804 = vmatprep.subr.bf16.mxu0 0
      %1805 = vmatpush2.bf16.msra.mxu0 0
      %1806 = vmatprep.subr.bf16.mxu0 0
      %1807 = vmatpush2.bf16.msra.mxu0 0
      %1808 = vmatprep.subr.bf16.mxu0 0
      %1809 = vmatpush2.bf16.msra.mxu0 0
      %1810 = vmatprep.subr.bf16.mxu0 0
      %1811 = vmatpush2.bf16.msra.mxu0 0
      %1812 = vmatprep.subr.bf16.mxu0 0
      %1813 = vmatpush2.bf16.msra.mxu0 0
      %1814 = vmatprep.mubr.bf16.mxu0 0
      %1815 = vmatmul.mubr.bf16.gmra.mxu0 %v1701
      %v1816 = vpop.f32.mrf.mxu0
      %v1817 = vadd.f32 %v1726, %v1816
      %v1818 = vpop.f32.mrf.mxu0
      %v1819 = vpop.f32.mrf.mxu0
      %v1820 = vadd.f32 %v1727, %v1819
      %v1821 = vpop.f32.mrf.mxu0
      %1822 = vmatprep.mubr.bf16.mxu0 0
      %1823 = vmatmul.mubr.bf16.gmra.mxu0 %v1702
      %v1824 = vpop.f32.mrf.mxu0
      %v1825 = vadd.f32 %v1728, %v1824
      %v1826 = vpop.f32.mrf.mxu0
      %v1827 = vpop.f32.mrf.mxu0
      %v1828 = vadd.f32 %v1729, %v1827
      %v1829 = vpop.f32.mrf.mxu0
      %1830 = vmatprep.mubr.bf16.mxu0 0
      %1831 = vmatmul.mubr.bf16.gmra.mxu0 %v1703
      %v1832 = vpop.f32.mrf.mxu0
      %v1833 = vadd.f32 %v1730, %v1832
      %v1834 = vpop.f32.mrf.mxu0
      %v1835 = vpop.f32.mrf.mxu0
      %v1836 = vadd.f32 %v1731, %v1835
      %v1837 = vpop.f32.mrf.mxu0
      %1838 = vmatprep.mubr.bf16.mxu0 0
      %1839 = vmatmul.mubr.bf16.gmra.mxu0 %v1704
      %v1840 = vpop.f32.mrf.mxu0
      %v1841 = vadd.f32 %v1732, %v1840
      %v1842 = vpop.f32.mrf.mxu0
      %v1843 = vpop.f32.mrf.mxu0
      %v1844 = vadd.f32 %v1733, %v1843
      %v1845 = vpop.f32.mrf.mxu0
      %1846 = vdwg.mxu0
      %v1847 = vlaneseq
      %v1848 = vshrl.u32 %v1847, 7
      %v1849 = vsub.s32 2, %v1848
      %v1850 = vrot.slane %v363, %v1849
      %v1851 = vmul.f32 %v806, %v1850
      %v1852 = vmul.f32 %v810, %v1850
      %v1853 = vmul.f32 %v814, %v1850
      %v1854 = vmul.f32 %v818, %v1850
      %v1855 = vmul.f32 %v822, %v1850
      %v1856 = vmul.f32 %v826, %v1850
      %v1857 = vmul.f32 %v830, %v1850
      %v1858 = vmul.f32 %v834, %v1850
      %v1859 = vadd.f32 %v1817, %v1851
      %v1860 = vadd.f32 %v1820, %v1852
      %v1861 = vadd.f32 %v1825, %v1853
      %v1862 = vadd.f32 %v1828, %v1854
      %v1863 = vadd.f32 %v1833, %v1855
      %v1864 = vadd.f32 %v1836, %v1856
      %v1865 = vadd.f32 %v1841, %v1857
      %v1866 = vadd.f32 %v1844, %v1858
      %v1867 = vlaneseq
      %v1868 = vshrl.u32 %v1867, 7
      %v1869 = vsub.s32 0, %v1868
      %v1870 = vrot.slane %v739, %v1869
      %v1871 = vadd.f32 %v1859, %v1870
      %v1872 = vadd.f32 %v1860, %v1870
      %v1873 = vadd.f32 %v1861, %v1870
      %v1874 = vadd.f32 %v1862, %v1870
      %v1875 = vadd.f32 %v1863, %v1870
      %v1876 = vadd.f32 %v1864, %v1870
      %v1877 = vadd.f32 %v1865, %v1870
      %v1878 = vadd.f32 %v1866, %v1870
      %v1879 = vstv %s1700
      %v1880 = vmul.f32 %v1879, %v363
      %v1881 = vlaneseq
      %v1882 = vshrl.u32 %v1881, 7
      %v1883 = vsub.s32 0, %v1882
      %v1884 = vrot.slane %v1880, %v1883
      %v1885 = vadd.f32 %v1871, %v1884
      %v1886 = vadd.f32 %v1872, %v1884
      %v1887 = vadd.f32 %v1873, %v1884
      %v1888 = vadd.f32 %v1874, %v1884
      %v1889 = vadd.f32 %v1875, %v1884
      %v1890 = vadd.f32 %v1876, %v1884
      %v1891 = vadd.f32 %v1877, %v1884
      %v1892 = vadd.f32 %v1878, %v1884
      %v1893 = vlaneseq
      %v1894 = vshrl.u32 %v1893, 7
      %v1895 = vsub.s32 3, %v1894
      %v1896 = vrot.slane %v362, %v1895
      %v1897 = vadd.f32 %v1885, %v1896
      %v1898 = vadd.f32 %v1886, %v1896
      %v1899 = vadd.f32 %v1887, %v1896
      %v1900 = vadd.f32 %v1888, %v1896
      %v1901 = vadd.f32 %v1889, %v1896
      %v1902 = vadd.f32 %v1890, %v1896
      %v1903 = vadd.f32 %v1891, %v1896
      %v1904 = vadd.f32 %v1892, %v1896
      %v1905 = vmax.f32 %v1897, 0.0
      %v1906 = vmax.f32 %v1898, 0.0
      %v1907 = vmax.f32 %v1899, 0.0
      %v1908 = vmax.f32 %v1900, 0.0
      %v1909 = vmax.f32 %v1901, 0.0
      %v1910 = vmax.f32 %v1902, 0.0
      %v1911 = vmax.f32 %v1903, 0.0
      %v1912 = vmax.f32 %v1904, 0.0
      %v1913 = vpack.c.bf16 %v1906, %v1905
      %v1914 = vpack.c.bf16 %v1908, %v1907
      %v1915 = vpack.c.bf16 %v1910, %v1909
      %v1916 = vpack.c.bf16 %v1912, %v1911
      %s1917 = scalar_lea.vmem %s6, 192
      %v1918 = vld [vmem:[%s1917] sm:$0xf]
      %v1919 = vld [vmem:[%s1917 + $0x4] sm:$0xf]
      %v1920 = vld [vmem:[%s1917 + $0x8] sm:$0xf]
      %v1921 = vld [vmem:[%s1917 + $0xc] sm:$0xf]
      %v1922 = vld [vmem:[%s1917 + $0x10] sm:$0xf]
      %v1923 = vld [vmem:[%s1917 + $0x14] sm:$0xf]
      %v1924 = vld [vmem:[%s1917 + $0x18] sm:$0xf]
      %v1925 = vld [vmem:[%s1917 + $0x1c] sm:$0xf]
      %v1926 = vld [vmem:[%s1917 + $0x20] sm:$0xf]
      %v1927 = vld [vmem:[%s1917 + $0x24] sm:$0xf]
      %v1928 = vld [vmem:[%s1917 + $0x28] sm:$0xf]
      %v1929 = vld [vmem:[%s1917 + $0x2c] sm:$0xf]
      %v1930 = vld [vmem:[%s1917 + $0x30] sm:$0xf]
      %v1931 = vld [vmem:[%s1917 + $0x34] sm:$0xf]
      %v1932 = vld [vmem:[%s1917 + $0x38] sm:$0xf]
      %v1933 = vld [vmem:[%s1917 + $0x3c] sm:$0xf]
      %v1934 = vlaneseq
      %v1935 = vshrl.u32 %v1934, 7
      %v1936 = vsub.s32 4, %v1935
      %v1937 = vrot.slane %v362, %v1936
      %v1954 = vunpack.c.l.b16 %v1918
      %v1955 = vunpack.c.l.b16 %v1919
      %v1956 = vunpack.c.l.b16 %v1920
      %v1957 = vunpack.c.l.b16 %v1921
      %v1958 = vunpack.c.l.b16 %v1922
      %v1959 = vunpack.c.l.b16 %v1923
      %v1960 = vunpack.c.l.b16 %v1924
      %v1961 = vunpack.c.l.b16 %v1925
      %v1962 = vunpack.c.l.b16 %v1926
      %v1963 = vunpack.c.l.b16 %v1927
      %v1964 = vunpack.c.l.b16 %v1928
      %v1965 = vunpack.c.l.b16 %v1929
      %v1966 = vunpack.c.l.b16 %v1930
      %v1967 = vunpack.c.l.b16 %v1931
      %v1968 = vunpack.c.l.b16 %v1932
      %v1969 = vunpack.c.l.b16 %v1933
      %v1970 = vpack.c.b16 %v1955, %v1954
      %v1971 = vpack.c.b16 %v1957, %v1956
      %v1972 = vpack.c.b16 %v1959, %v1958
      %v1973 = vpack.c.b16 %v1961, %v1960
      %v1974 = vpack.c.b16 %v1963, %v1962
      %v1975 = vpack.c.b16 %v1965, %v1964
      %v1976 = vpack.c.b16 %v1967, %v1966
      %v1977 = vpack.c.b16 %v1969, %v1968
      %1986 = vmatprep.subr.bf16.mxu0 0
      %1987 = vmatpush1.bf16.msra.mxu0 %v1977
      %1988 = vmatprep.subr.bf16.mxu0 0
      %1989 = vmatpush1.bf16.msra.mxu0 %v1976
      %1990 = vmatprep.subr.bf16.mxu0 0
      %1991 = vmatpush1.bf16.msra.mxu0 %v1975
      %1992 = vmatprep.subr.bf16.mxu0 0
      %1993 = vmatpush1.bf16.msra.mxu0 %v1974
      %1994 = vmatprep.subr.bf16.mxu0 0
      %1995 = vmatpush1.bf16.msra.mxu0 %v1973
      %1996 = vmatprep.subr.bf16.mxu0 0
      %1997 = vmatpush1.bf16.msra.mxu0 %v1972
      %1998 = vmatprep.subr.bf16.mxu0 0
      %1999 = vmatpush1.bf16.msra.mxu0 %v1971
      %2000 = vmatprep.subr.bf16.mxu0 0
      %2001 = vmatpush1.bf16.msra.mxu0 %v1970
      %2002 = vmatprep.subr.bf16.mxu0 0
      %2003 = vmatpush2.bf16.msra.mxu0 0
      %2004 = vmatprep.subr.bf16.mxu0 0
      %2005 = vmatpush2.bf16.msra.mxu0 0
      %2006 = vmatprep.subr.bf16.mxu0 0
      %2007 = vmatpush2.bf16.msra.mxu0 0
      %2008 = vmatprep.subr.bf16.mxu0 0
      %2009 = vmatpush2.bf16.msra.mxu0 0
      %2010 = vmatprep.subr.bf16.mxu0 0
      %2011 = vmatpush2.bf16.msra.mxu0 0
      %2012 = vmatprep.subr.bf16.mxu0 0
      %2013 = vmatpush2.bf16.msra.mxu0 0
      %2014 = vmatprep.subr.bf16.mxu0 0
      %2015 = vmatpush2.bf16.msra.mxu0 0
      %2016 = vmatprep.subr.bf16.mxu0 0
      %2017 = vmatpush2.bf16.msra.mxu0 0
      %2018 = vmatprep.mubr.bf16.mxu0 0
      %2019 = vmatmul.mubr.bf16.gmra.mxu0 %v1913
      %v2020 = vpop.f32.mrf.mxu0
      %v2021 = vadd.f32 %v1937, %v2020
      %v2022 = vpop.f32.mrf.mxu0
      %v2023 = vpop.f32.mrf.mxu0
      %v2024 = vadd.f32 %v1937, %v2023
      %v2025 = vpop.f32.mrf.mxu0
      %2026 = vmatprep.mubr.bf16.mxu0 0
      %2027 = vmatmul.mubr.bf16.gmra.mxu0 %v1914
      %v2028 = vpop.f32.mrf.mxu0
      %v2029 = vadd.f32 %v1937, %v2028
      %v2030 = vpop.f32.mrf.mxu0
      %v2031 = vpop.f32.mrf.mxu0
      %v2032 = vadd.f32 %v1937, %v2031
      %v2033 = vpop.f32.mrf.mxu0
      %2034 = vmatprep.mubr.bf16.mxu0 0
      %2035 = vmatmul.mubr.bf16.gmra.mxu0 %v1915
      %v2036 = vpop.f32.mrf.mxu0
      %v2037 = vadd.f32 %v1937, %v2036
      %v2038 = vpop.f32.mrf.mxu0
      %v2039 = vpop.f32.mrf.mxu0
      %v2040 = vadd.f32 %v1937, %v2039
      %v2041 = vpop.f32.mrf.mxu0
      %2042 = vmatprep.mubr.bf16.mxu0 0
      %2043 = vmatmul.mubr.bf16.gmra.mxu0 %v1916
      %v2044 = vpop.f32.mrf.mxu0
      %v2045 = vadd.f32 %v1937, %v2044
      %v2046 = vpop.f32.mrf.mxu0
      %v2047 = vpop.f32.mrf.mxu0
      %v2048 = vadd.f32 %v1937, %v2047
      %v2049 = vpop.f32.mrf.mxu0
      %2050 = vdwg.mxu0
      %v2051 = vmax.f32 %v2021, 0.0
      %v2052 = vmax.f32 %v2024, 0.0
      %v2053 = vmax.f32 %v2029, 0.0
      %v2054 = vmax.f32 %v2032, 0.0
      %v2055 = vmax.f32 %v2037, 0.0
      %v2056 = vmax.f32 %v2040, 0.0
      %v2057 = vmax.f32 %v2045, 0.0
      %v2058 = vmax.f32 %v2048, 0.0
      %v2059 = vpack.c.bf16 %v2052, %v2051
      %v2060 = vpack.c.bf16 %v2054, %v2053
      %v2061 = vpack.c.bf16 %v2056, %v2055
      %v2062 = vpack.c.bf16 %v2058, %v2057
      %s2063 = scalar_lea.vmem %s6, 256
      %v2064 = vld [vmem:[%s2063] sm:$0xf]
      %v2065 = vld [vmem:[%s2063 + $0x4] sm:$0xf]
      %v2066 = vld [vmem:[%s2063 + $0x8] sm:$0xf]
      %v2067 = vld [vmem:[%s2063 + $0xc] sm:$0xf]
      %v2068 = vld [vmem:[%s2063 + $0x10] sm:$0xf]
      %v2069 = vld [vmem:[%s2063 + $0x14] sm:$0xf]
      %v2070 = vld [vmem:[%s2063 + $0x18] sm:$0xf]
      %v2071 = vld [vmem:[%s2063 + $0x1c] sm:$0xf]
      %v2072 = vld [vmem:[%s2063 + $0x20] sm:$0xf]
      %v2073 = vld [vmem:[%s2063 + $0x24] sm:$0xf]
      %v2074 = vld [vmem:[%s2063 + $0x28] sm:$0xf]
      %v2075 = vld [vmem:[%s2063 + $0x2c] sm:$0xf]
      %v2076 = vld [vmem:[%s2063 + $0x30] sm:$0xf]
      %v2077 = vld [vmem:[%s2063 + $0x34] sm:$0xf]
      %v2078 = vld [vmem:[%s2063 + $0x38] sm:$0xf]
      %v2079 = vld [vmem:[%s2063 + $0x3c] sm:$0xf]
      %v2080 = vlaneseq
      %v2081 = vshrl.u32 %v2080, 7
      %v2082 = vsub.s32 5, %v2081
      %v2083 = vrot.slane %v362, %v2082
      %v2100 = vunpack.c.l.b16 %v2064
      %v2101 = vunpack.c.l.b16 %v2065
      %v2102 = vunpack.c.l.b16 %v2066
      %v2103 = vunpack.c.l.b16 %v2067
      %v2104 = vunpack.c.l.b16 %v2068
      %v2105 = vunpack.c.l.b16 %v2069
      %v2106 = vunpack.c.l.b16 %v2070
      %v2107 = vunpack.c.l.b16 %v2071
      %v2108 = vunpack.c.l.b16 %v2072
      %v2109 = vunpack.c.l.b16 %v2073
      %v2110 = vunpack.c.l.b16 %v2074
      %v2111 = vunpack.c.l.b16 %v2075
      %v2112 = vunpack.c.l.b16 %v2076
      %v2113 = vunpack.c.l.b16 %v2077
      %v2114 = vunpack.c.l.b16 %v2078
      %v2115 = vunpack.c.l.b16 %v2079
      %v2116 = vpack.c.b16 %v2101, %v2100
      %v2117 = vpack.c.b16 %v2103, %v2102
      %v2118 = vpack.c.b16 %v2105, %v2104
      %v2119 = vpack.c.b16 %v2107, %v2106
      %v2120 = vpack.c.b16 %v2109, %v2108
      %v2121 = vpack.c.b16 %v2111, %v2110
      %v2122 = vpack.c.b16 %v2113, %v2112
      %v2123 = vpack.c.b16 %v2115, %v2114
      %2132 = vmatprep.subr.bf16.mxu0 0
      %2133 = vmatpush1.bf16.msra.mxu0 %v2123
      %2134 = vmatprep.subr.bf16.mxu0 0
      %2135 = vmatpush1.bf16.msra.mxu0 %v2122
      %2136 = vmatprep.subr.bf16.mxu0 0
      %2137 = vmatpush1.bf16.msra.mxu0 %v2121
      %2138 = vmatprep.subr.bf16.mxu0 0
      %2139 = vmatpush1.bf16.msra.mxu0 %v2120
      %2140 = vmatprep.subr.bf16.mxu0 0
      %2141 = vmatpush1.bf16.msra.mxu0 %v2119
      %2142 = vmatprep.subr.bf16.mxu0 0
      %2143 = vmatpush1.bf16.msra.mxu0 %v2118
      %2144 = vmatprep.subr.bf16.mxu0 0
      %2145 = vmatpush1.bf16.msra.mxu0 %v2117
      %2146 = vmatprep.subr.bf16.mxu0 0
      %2147 = vmatpush1.bf16.msra.mxu0 %v2116
      %2148 = vmatprep.subr.bf16.mxu0 0
      %2149 = vmatpush2.bf16.msra.mxu0 0
      %2150 = vmatprep.subr.bf16.mxu0 0
      %2151 = vmatpush2.bf16.msra.mxu0 0
      %2152 = vmatprep.subr.bf16.mxu0 0
      %2153 = vmatpush2.bf16.msra.mxu0 0
      %2154 = vmatprep.subr.bf16.mxu0 0
      %2155 = vmatpush2.bf16.msra.mxu0 0
      %2156 = vmatprep.subr.bf16.mxu0 0
      %2157 = vmatpush2.bf16.msra.mxu0 0
      %2158 = vmatprep.subr.bf16.mxu0 0
      %2159 = vmatpush2.bf16.msra.mxu0 0
      %2160 = vmatprep.subr.bf16.mxu0 0
      %2161 = vmatpush2.bf16.msra.mxu0 0
      %2162 = vmatprep.subr.bf16.mxu0 0
      %2163 = vmatpush2.bf16.msra.mxu0 0
      %2164 = vmatprep.mubr.bf16.mxu0 0
      %2165 = vmatmul.mubr.bf16.gmra.mxu0 %v2059
      %v2166 = vpop.f32.mrf.mxu0
      %v2167 = vadd.f32 %v2083, %v2166
      %v2168 = vpop.f32.mrf.mxu0
      %v2169 = vpop.f32.mrf.mxu0
      %v2170 = vadd.f32 %v2083, %v2169
      %v2171 = vpop.f32.mrf.mxu0
      %2172 = vmatprep.mubr.bf16.mxu0 0
      %2173 = vmatmul.mubr.bf16.gmra.mxu0 %v2060
      %v2174 = vpop.f32.mrf.mxu0
      %v2175 = vadd.f32 %v2083, %v2174
      %v2176 = vpop.f32.mrf.mxu0
      %v2177 = vpop.f32.mrf.mxu0
      %v2178 = vadd.f32 %v2083, %v2177
      %v2179 = vpop.f32.mrf.mxu0
      %2180 = vmatprep.mubr.bf16.mxu0 0
      %2181 = vmatmul.mubr.bf16.gmra.mxu0 %v2061
      %v2182 = vpop.f32.mrf.mxu0
      %v2183 = vadd.f32 %v2083, %v2182
      %v2184 = vpop.f32.mrf.mxu0
      %v2185 = vpop.f32.mrf.mxu0
      %v2186 = vadd.f32 %v2083, %v2185
      %v2187 = vpop.f32.mrf.mxu0
      %2188 = vmatprep.mubr.bf16.mxu0 0
      %2189 = vmatmul.mubr.bf16.gmra.mxu0 %v2062
      %v2190 = vpop.f32.mrf.mxu0
      %v2191 = vadd.f32 %v2083, %v2190
      %v2192 = vpop.f32.mrf.mxu0
      %v2193 = vpop.f32.mrf.mxu0
      %v2194 = vadd.f32 %v2083, %v2193
      %v2195 = vpop.f32.mrf.mxu0
      %2196 = vdwg.mxu0
      %v2197 = vmax.f32 %v2167, 0.0
      %v2198 = vmax.f32 %v2170, 0.0
      %v2199 = vmax.f32 %v2175, 0.0
      %v2200 = vmax.f32 %v2178, 0.0
      %v2201 = vmax.f32 %v2183, 0.0
      %v2202 = vmax.f32 %v2186, 0.0
      %v2203 = vmax.f32 %v2191, 0.0
      %v2204 = vmax.f32 %v2194, 0.0
      %v2205 = vpack.c.bf16 %v2198, %v2197
      %v2206 = vpack.c.bf16 %v2200, %v2199
      %v2207 = vpack.c.bf16 %v2202, %v2201
      %v2208 = vpack.c.bf16 %v2204, %v2203
      %s2209 = scalar_lea.vmem %s6, 320
      %v2210 = vld [vmem:[%s2209] sm:$0xf]
      %v2211 = vld [vmem:[%s2209 + $0x4] sm:$0xf]
      %v2212 = vld [vmem:[%s2209 + $0x8] sm:$0xf]
      %v2213 = vld [vmem:[%s2209 + $0xc] sm:$0xf]
      %v2214 = vld [vmem:[%s2209 + $0x10] sm:$0xf]
      %v2215 = vld [vmem:[%s2209 + $0x14] sm:$0xf]
      %v2216 = vld [vmem:[%s2209 + $0x18] sm:$0xf]
      %v2217 = vld [vmem:[%s2209 + $0x1c] sm:$0xf]
      %v2218 = vld [vmem:[%s2209 + $0x20] sm:$0xf]
      %v2219 = vld [vmem:[%s2209 + $0x24] sm:$0xf]
      %v2220 = vld [vmem:[%s2209 + $0x28] sm:$0xf]
      %v2221 = vld [vmem:[%s2209 + $0x2c] sm:$0xf]
      %v2222 = vld [vmem:[%s2209 + $0x30] sm:$0xf]
      %v2223 = vld [vmem:[%s2209 + $0x34] sm:$0xf]
      %v2224 = vld [vmem:[%s2209 + $0x38] sm:$0xf]
      %v2225 = vld [vmem:[%s2209 + $0x3c] sm:$0xf]
      %v2226 = vlaneseq
      %v2227 = vshrl.u32 %v2226, 7
      %v2228 = vsub.s32 6, %v2227
      %v2229 = vrot.slane %v362, %v2228
      %v2246 = vunpack.c.l.b16 %v2210
      %v2247 = vunpack.c.l.b16 %v2211
      %v2248 = vunpack.c.l.b16 %v2212
      %v2249 = vunpack.c.l.b16 %v2213
      %v2250 = vunpack.c.l.b16 %v2214
      %v2251 = vunpack.c.l.b16 %v2215
      %v2252 = vunpack.c.l.b16 %v2216
      %v2253 = vunpack.c.l.b16 %v2217
      %v2254 = vunpack.c.l.b16 %v2218
      %v2255 = vunpack.c.l.b16 %v2219
      %v2256 = vunpack.c.l.b16 %v2220
      %v2257 = vunpack.c.l.b16 %v2221
      %v2258 = vunpack.c.l.b16 %v2222
      %v2259 = vunpack.c.l.b16 %v2223
      %v2260 = vunpack.c.l.b16 %v2224
      %v2261 = vunpack.c.l.b16 %v2225
      %v2262 = vpack.c.b16 %v2247, %v2246
      %v2263 = vpack.c.b16 %v2249, %v2248
      %v2264 = vpack.c.b16 %v2251, %v2250
      %v2265 = vpack.c.b16 %v2253, %v2252
      %v2266 = vpack.c.b16 %v2255, %v2254
      %v2267 = vpack.c.b16 %v2257, %v2256
      %v2268 = vpack.c.b16 %v2259, %v2258
      %v2269 = vpack.c.b16 %v2261, %v2260
      %2278 = vmatprep.subr.bf16.mxu0 0
      %2279 = vmatpush1.bf16.msra.mxu0 %v2269
      %2280 = vmatprep.subr.bf16.mxu0 0
      %2281 = vmatpush1.bf16.msra.mxu0 %v2268
      %2282 = vmatprep.subr.bf16.mxu0 0
      %2283 = vmatpush1.bf16.msra.mxu0 %v2267
      %2284 = vmatprep.subr.bf16.mxu0 0
      %2285 = vmatpush1.bf16.msra.mxu0 %v2266
      %2286 = vmatprep.subr.bf16.mxu0 0
      %2287 = vmatpush1.bf16.msra.mxu0 %v2265
      %2288 = vmatprep.subr.bf16.mxu0 0
      %2289 = vmatpush1.bf16.msra.mxu0 %v2264
      %2290 = vmatprep.subr.bf16.mxu0 0
      %2291 = vmatpush1.bf16.msra.mxu0 %v2263
      %2292 = vmatprep.subr.bf16.mxu0 0
      %2293 = vmatpush1.bf16.msra.mxu0 %v2262
      %2294 = vmatprep.subr.bf16.mxu0 0
      %2295 = vmatpush2.bf16.msra.mxu0 0
      %2296 = vmatprep.subr.bf16.mxu0 0
      %2297 = vmatpush2.bf16.msra.mxu0 0
      %2298 = vmatprep.subr.bf16.mxu0 0
      %2299 = vmatpush2.bf16.msra.mxu0 0
      %2300 = vmatprep.subr.bf16.mxu0 0
      %2301 = vmatpush2.bf16.msra.mxu0 0
      %2302 = vmatprep.subr.bf16.mxu0 0
      %2303 = vmatpush2.bf16.msra.mxu0 0
      %2304 = vmatprep.subr.bf16.mxu0 0
      %2305 = vmatpush2.bf16.msra.mxu0 0
      %2306 = vmatprep.subr.bf16.mxu0 0
      %2307 = vmatpush2.bf16.msra.mxu0 0
      %2308 = vmatprep.subr.bf16.mxu0 0
      %2309 = vmatpush2.bf16.msra.mxu0 0
      %2310 = vmatprep.mubr.bf16.mxu0 0
      %2311 = vmatmul.mubr.bf16.gmra.mxu0 %v2205
      %v2312 = vpop.f32.mrf.mxu0
      %v2313 = vadd.f32 %v2229, %v2312
      %v2314 = vpop.f32.mrf.mxu0
      %v2315 = vpop.f32.mrf.mxu0
      %v2316 = vadd.f32 %v2229, %v2315
      %v2317 = vpop.f32.mrf.mxu0
      %2318 = vmatprep.mubr.bf16.mxu0 0
      %2319 = vmatmul.mubr.bf16.gmra.mxu0 %v2206
      %v2320 = vpop.f32.mrf.mxu0
      %v2321 = vadd.f32 %v2229, %v2320
      %v2322 = vpop.f32.mrf.mxu0
      %v2323 = vpop.f32.mrf.mxu0
      %v2324 = vadd.f32 %v2229, %v2323
      %v2325 = vpop.f32.mrf.mxu0
      %2326 = vmatprep.mubr.bf16.mxu0 0
      %2327 = vmatmul.mubr.bf16.gmra.mxu0 %v2207
      %v2328 = vpop.f32.mrf.mxu0
      %v2329 = vadd.f32 %v2229, %v2328
      %v2330 = vpop.f32.mrf.mxu0
      %v2331 = vpop.f32.mrf.mxu0
      %v2332 = vadd.f32 %v2229, %v2331
      %v2333 = vpop.f32.mrf.mxu0
      %2334 = vmatprep.mubr.bf16.mxu0 0
      %2335 = vmatmul.mubr.bf16.gmra.mxu0 %v2208
      %v2336 = vpop.f32.mrf.mxu0
      %v2337 = vadd.f32 %v2229, %v2336
      %v2338 = vpop.f32.mrf.mxu0
      %v2339 = vpop.f32.mrf.mxu0
      %v2340 = vadd.f32 %v2229, %v2339
      %v2341 = vpop.f32.mrf.mxu0
      %2342 = vdwg.mxu0
      %v2343 = vmax.f32 %v2313, 0.0
      %v2344 = vmax.f32 %v2316, 0.0
      %v2345 = vmax.f32 %v2321, 0.0
      %v2346 = vmax.f32 %v2324, 0.0
      %v2347 = vmax.f32 %v2329, 0.0
      %v2348 = vmax.f32 %v2332, 0.0
      %v2349 = vmax.f32 %v2337, 0.0
      %v2350 = vmax.f32 %v2340, 0.0
      %v2351 = vpack.c.bf16 %v2344, %v2343
      %v2352 = vpack.c.bf16 %v2346, %v2345
      %v2353 = vpack.c.bf16 %v2348, %v2347
      %v2354 = vpack.c.bf16 %v2350, %v2349
      %s2355 = scalar_lea.vmem %s6, 384
      %v2356 = vld [vmem:[%s2355] sm:$0xf]
      %v2357 = vld [vmem:[%s2355 + $0x4] sm:$0xf]
      %v2358 = vld [vmem:[%s2355 + $0x8] sm:$0xf]
      %v2359 = vld [vmem:[%s2355 + $0xc] sm:$0xf]
      %v2360 = vld [vmem:[%s2355 + $0x10] sm:$0xf]
      %v2361 = vld [vmem:[%s2355 + $0x14] sm:$0xf]
      %v2362 = vld [vmem:[%s2355 + $0x18] sm:$0xf]
      %v2363 = vld [vmem:[%s2355 + $0x1c] sm:$0xf]
      %v2364 = vld [vmem:[%s2355 + $0x20] sm:$0xf]
      %v2365 = vld [vmem:[%s2355 + $0x24] sm:$0xf]
      %v2366 = vld [vmem:[%s2355 + $0x28] sm:$0xf]
      %v2367 = vld [vmem:[%s2355 + $0x2c] sm:$0xf]
      %v2368 = vld [vmem:[%s2355 + $0x30] sm:$0xf]
      %v2369 = vld [vmem:[%s2355 + $0x34] sm:$0xf]
      %v2370 = vld [vmem:[%s2355 + $0x38] sm:$0xf]
      %v2371 = vld [vmem:[%s2355 + $0x3c] sm:$0xf]
      %v2372 = vlaneseq
      %v2373 = vshrl.u32 %v2372, 7
      %v2374 = vsub.s32 7, %v2373
      %v2375 = vrot.slane %v362, %v2374
      %v2392 = vunpack.c.l.b16 %v2356
      %v2393 = vunpack.c.l.b16 %v2357
      %v2394 = vunpack.c.l.b16 %v2358
      %v2395 = vunpack.c.l.b16 %v2359
      %v2396 = vunpack.c.l.b16 %v2360
      %v2397 = vunpack.c.l.b16 %v2361
      %v2398 = vunpack.c.l.b16 %v2362
      %v2399 = vunpack.c.l.b16 %v2363
      %v2400 = vunpack.c.l.b16 %v2364
      %v2401 = vunpack.c.l.b16 %v2365
      %v2402 = vunpack.c.l.b16 %v2366
      %v2403 = vunpack.c.l.b16 %v2367
      %v2404 = vunpack.c.l.b16 %v2368
      %v2405 = vunpack.c.l.b16 %v2369
      %v2406 = vunpack.c.l.b16 %v2370
      %v2407 = vunpack.c.l.b16 %v2371
      %v2408 = vpack.c.b16 %v2393, %v2392
      %v2409 = vpack.c.b16 %v2395, %v2394
      %v2410 = vpack.c.b16 %v2397, %v2396
      %v2411 = vpack.c.b16 %v2399, %v2398
      %v2412 = vpack.c.b16 %v2401, %v2400
      %v2413 = vpack.c.b16 %v2403, %v2402
      %v2414 = vpack.c.b16 %v2405, %v2404
      %v2415 = vpack.c.b16 %v2407, %v2406
      %2424 = vmatprep.subr.bf16.mxu0 0
      %2425 = vmatpush1.bf16.msra.mxu0 %v2415
      %2426 = vmatprep.subr.bf16.mxu0 0
      %2427 = vmatpush1.bf16.msra.mxu0 %v2414
      %2428 = vmatprep.subr.bf16.mxu0 0
      %2429 = vmatpush1.bf16.msra.mxu0 %v2413
      %2430 = vmatprep.subr.bf16.mxu0 0
      %2431 = vmatpush1.bf16.msra.mxu0 %v2412
      %2432 = vmatprep.subr.bf16.mxu0 0
      %2433 = vmatpush1.bf16.msra.mxu0 %v2411
      %2434 = vmatprep.subr.bf16.mxu0 0
      %2435 = vmatpush1.bf16.msra.mxu0 %v2410
      %2436 = vmatprep.subr.bf16.mxu0 0
      %2437 = vmatpush1.bf16.msra.mxu0 %v2409
      %2438 = vmatprep.subr.bf16.mxu0 0
      %2439 = vmatpush1.bf16.msra.mxu0 %v2408
      %2440 = vmatprep.subr.bf16.mxu0 0
      %2441 = vmatpush2.bf16.msra.mxu0 0
      %2442 = vmatprep.subr.bf16.mxu0 0
      %2443 = vmatpush2.bf16.msra.mxu0 0
      %2444 = vmatprep.subr.bf16.mxu0 0
      %2445 = vmatpush2.bf16.msra.mxu0 0
      %2446 = vmatprep.subr.bf16.mxu0 0
      %2447 = vmatpush2.bf16.msra.mxu0 0
      %2448 = vmatprep.subr.bf16.mxu0 0
      %2449 = vmatpush2.bf16.msra.mxu0 0
      %2450 = vmatprep.subr.bf16.mxu0 0
      %2451 = vmatpush2.bf16.msra.mxu0 0
      %2452 = vmatprep.subr.bf16.mxu0 0
      %2453 = vmatpush2.bf16.msra.mxu0 0
      %2454 = vmatprep.subr.bf16.mxu0 0
      %2455 = vmatpush2.bf16.msra.mxu0 0
      %2456 = vmatprep.mubr.bf16.mxu0 0
      %2457 = vmatmul.mubr.bf16.gmra.mxu0 %v2351
      %v2458 = vpop.f32.mrf.mxu0
      %v2459 = vadd.f32 %v2375, %v2458
      %v2460 = vpop.f32.mrf.mxu0
      %v2461 = vpop.f32.mrf.mxu0
      %v2462 = vadd.f32 %v2375, %v2461
      %v2463 = vpop.f32.mrf.mxu0
      %2464 = vmatprep.mubr.bf16.mxu0 0
      %2465 = vmatmul.mubr.bf16.gmra.mxu0 %v2352
      %v2466 = vpop.f32.mrf.mxu0
      %v2467 = vadd.f32 %v2375, %v2466
      %v2468 = vpop.f32.mrf.mxu0
      %v2469 = vpop.f32.mrf.mxu0
      %v2470 = vadd.f32 %v2375, %v2469
      %v2471 = vpop.f32.mrf.mxu0
      %2472 = vmatprep.mubr.bf16.mxu0 0
      %2473 = vmatmul.mubr.bf16.gmra.mxu0 %v2353
      %v2474 = vpop.f32.mrf.mxu0
      %v2475 = vadd.f32 %v2375, %v2474
      %v2476 = vpop.f32.mrf.mxu0
      %v2477 = vpop.f32.mrf.mxu0
      %v2478 = vadd.f32 %v2375, %v2477
      %v2479 = vpop.f32.mrf.mxu0
      %2480 = vmatprep.mubr.bf16.mxu0 0
      %2481 = vmatmul.mubr.bf16.gmra.mxu0 %v2354
      %v2482 = vpop.f32.mrf.mxu0
      %v2483 = vadd.f32 %v2375, %v2482
      %v2484 = vpop.f32.mrf.mxu0
      %v2485 = vpop.f32.mrf.mxu0
      %v2486 = vadd.f32 %v2375, %v2485
      %v2487 = vpop.f32.mrf.mxu0
      %2488 = vdwg.mxu0
      %2489 = vset.pattern.permute.xlu0 2
      %2490 = vperm.xlu0 %2489, %v744
      %v2491 = vpop.permute.xlu0 %2490
      %2493 = vset.pattern.permute.xlu0 2
      %2494 = vperm.xlu0 %2493, %v745
      %v2495 = vpop.permute.xlu0 %2494
      %2497 = vset.pattern.permute.xlu0 2
      %2498 = vperm.xlu0 %2497, %v746
      %v2499 = vpop.permute.xlu0 %2498
      %2501 = vset.pattern.permute.xlu0 2
      %2502 = vperm.xlu0 %2501, %v747
      %v2503 = vpop.permute.xlu0 %2502
      %2505 = vset.pattern.permute.xlu0 2
      %2506 = vperm.xlu0 %2505, %v748
      %v2507 = vpop.permute.xlu0 %2506
      %2509 = vset.pattern.permute.xlu0 2
      %2510 = vperm.xlu0 %2509, %v749
      %v2511 = vpop.permute.xlu0 %2510
      %2513 = vset.pattern.permute.xlu0 2
      %2514 = vperm.xlu0 %2513, %v750
      %v2515 = vpop.permute.xlu0 %2514
      %2517 = vset.pattern.permute.xlu0 2
      %2518 = vperm.xlu0 %2517, %v751
      %v2519 = vpop.permute.xlu0 %2518
      %v2521 = vmul.f32 %v2459, %v2491
      %v2522 = vmul.f32 %v2462, %v2495
      %v2523 = vmul.f32 %v2467, %v2499
      %v2524 = vmul.f32 %v2470, %v2503
      %v2525 = vmul.f32 %v2475, %v2507
      %v2526 = vmul.f32 %v2478, %v2511
      %v2527 = vmul.f32 %v2483, %v2515
      %v2528 = vmul.f32 %v2486, %v2519
      %2529 = vst [vmem:[%s360] sm:$0xff] %v2521
      %2530 = vst [vmem:[%s360 + $0x8] sm:$0xff] %v2522
      %2531 = vst [vmem:[%s360 + $0x10] sm:$0xff] %v2523
      %2532 = vst [vmem:[%s360 + $0x18] sm:$0xff] %v2524
      %2533 = vst [vmem:[%s360 + $0x20] sm:$0xff] %v2525
      %2534 = vst [vmem:[%s360 + $0x28] sm:$0xff] %v2526
      %2535 = vst [vmem:[%s360 + $0x30] sm:$0xff] %v2527
      %2536 = vst [vmem:[%s360 + $0x38] sm:$0xff] %v2528
      %p2537 = scmp.lt.s32.totalorder %s20, 1
      %s2538 = scalar_select %p2537, %s20, 1
      %s2539 = smul.addr %s2538, 8
      %s2540 = smul.addr %s2539, 8
      %s2541 = scalar_lea.vmem %s8, %s2540
      // Predicated region
      $region53: #{_lambda_.1} parent=51 // pred_check
        %p2542 = pneg %p226
      $region54: #{_lambda_.1} parent=51 // pred_check_branch
        %2544 = sbr.rel (%p2542) target = $region56
      $region55: #{_lambda_.1} parent=51 // pred_region
        _
      $region56: #{_lambda_.1} parent=51 // pred_fallthru
        _
    $region52: #{_lambda_.1} parent=5 // pred_fallthru
      _
    %p2545 = scmp.le.s32.totalorder 2, %s15
    // Predicated region
    $region57: #{_lambda_.1} parent=5 // pred_check
      %p2546 = pneg %p2545
    $region58: #{_lambda_.1} parent=5 // pred_check_branch
      %2548 = sbr.rel (%p2546) target = $region60
    $region59: #{_lambda_.1} parent=5 // pred_region
      %s2549 = ssub.s32 %s15, 2
      // Predicated region
      $region61: #{_lambda_.1} parent=59 // pred_check
        %p2550 = pneg %p232
      $region62: #{_lambda_.1} parent=59 // pred_check_branch
        %2552 = sbr.rel (%p2550) target = $region64
      $region63: #{_lambda_.1} parent=59 // pred_region
        %p2553 = scmp.lt.s32.totalorder %s21, 1
        %s2554 = scalar_select %p2553, %s21, 1
        %s2555 = smul.addr %s2554, 8
        %s2556 = smul.addr %s2555, 8
        %s2557 = scalar_lea.vmem %s8, %s2556
      $region64: #{_lambda_.1} parent=59 // pred_fallthru
        _
    $region60: #{_lambda_.1} parent=5 // pred_fallthru
      _
  $region6: #{_lambda_.1} parent=0 // loop_footer
    %s19 = sadd.s32 1, %s15
  $region7: #{_lambda_.1} parent=0 // loop_footer_branch
    %14 = sbr.rel target = $region3
  $region8: #{_lambda_.1} parent=0 // loop_exit
    _

</llo_original>
